<compile_context>
chip_gen: v7x
topology: tpu7x:2x2x1
jax: 0.10.0
libtpu: 0.0.40
codegen_flags: <defaults>
</compile_context>

<pallas_src>
import functools

import numpy as np
import jax
import jax.numpy as jnp
from jax.experimental import pallas as pl
from jax.experimental.pallas import tpu as pltpu

EPS = 1e-5


# ----------------------------- fused Pallas kernel ---------------------------

def _netd_fused_kernel(*refs, n_pyr, inv_counts):
    """Whole NetD forward in one kernel invocation (no grid).

    refs layout (inputs then outputs):
      x (N, H*W*C0), m_init (H*W*C0, P1),
      [m_l (P_l, P_{l+1}), gamma_l (1,C), beta_l (1,C),
       r_l (P,C) pos->chan 0/1, rt_l (C,P)] * n_pyr,
      m_final (P_last, 1),
      feat_out (N, P_last), cls_out (N, 1)
    """
    it = iter(refs)
    x_ref = next(it)
    m_init_ref = next(it)
    pyr = [tuple(next(it) for _ in range(5)) for _ in range(n_pyr)]
    m_final_ref = next(it)
    feat_ref = next(it)
    cls_ref = next(it)

    def leaky(v):
        return jnp.where(v >= 0, v, 0.2 * v)

    # initial conv (folded to a single matmul) + LeakyReLU(0.2)
    h = leaky(jnp.dot(x_ref[...], m_init_ref[...],
                      preferred_element_type=jnp.float32))

    # pyramid layers: conv + BatchNorm (training-mode batch stats) + LeakyReLU
    for l in range(n_pyr):
        m_ref, g_ref, b_ref, r_ref, rt_ref = pyr[l]
        a = jnp.dot(h, m_ref[...], preferred_element_type=jnp.float32)   # (N, P)
        r = r_ref[...]                       # (P, C)
        rt = rt_ref[...]                     # (C, P)
        inv_cnt = inv_counts[l]              # 1 / (N*OH*OW), python float

        # per-channel mean (two-pass variance for accuracy)
        col_sum = jnp.sum(a, axis=0, keepdims=True)                          # (1, P)
        ch_mean = jnp.dot(col_sum, r,
                          preferred_element_type=jnp.float32) * inv_cnt      # (1, C)
        mean_p = jnp.dot(ch_mean, rt, preferred_element_type=jnp.float32)    # (1, P)
        cen = a - mean_p
        col_sq = jnp.sum(cen * cen, axis=0, keepdims=True)                   # (1, P)
        ch_var = jnp.dot(col_sq, r,
                         preferred_element_type=jnp.float32) * inv_cnt       # (1, C)

        scale = g_ref[...] * jax.lax.rsqrt(ch_var + EPS)                     # (1, C)
        shift = b_ref[...] - ch_mean * scale                                 # (1, C)
        scale_p = jnp.dot(scale, rt, preferred_element_type=jnp.float32)     # (1, P)
        shift_p = jnp.dot(shift, rt, preferred_element_type=jnp.float32)     # (1, P)

        h = leaky(a * scale_p + shift_p)

    feat_ref[...] = h                                                        # lane-dense
    logits = jnp.dot(h, m_final_ref[...], preferred_element_type=jnp.float32)
    cls_ref[...] = jax.nn.sigmoid(logits)


# --------------------------- weight folding (one-time) -----------------------

def expand_conv_weight(w, in_h, in_w, stride, pad):
    """Fold a Conv2d(bias=False) weight (OC, IC, KH, KW) into a dense matrix M
    such that a channel-last-flat activation (N, H*W*IC) @ M equals the conv
    output flattened as (N, OH*OW*OC):
        M[(iy*W+ix)*IC + c, (oy*OW+ox)*OC + o] = w[o, c, ky, kx]
    Done once on static weights (numpy), never on the activation path."""
    w_np = np.asarray(w, dtype=np.float32)
    oc, ic, kh, kw = w_np.shape
    oh = (in_h + 2 * pad - kh) // stride + 1
    ow = (in_w + 2 * pad - kw) // stride + 1
    m = np.zeros((in_h * in_w * ic, oh * ow * oc), dtype=np.float32)
    for oy in range(oh):
        for ox in range(ow):
            col0 = (oy * ow + ox) * oc
            for ky in range(kh):
                iy = oy * stride - pad + ky
                if iy < 0 or iy >= in_h:
                    continue
                for kx in range(kw):
                    ix = ox * stride - pad + kx
                    if ix < 0 or ix >= in_w:
                        continue
                    row0 = (iy * in_w + ix) * ic
                    m[row0:row0 + ic, col0:col0 + oc] = w_np[:, :, ky, kx].T
    return jnp.asarray(m), (oh, ow, oc)


def fold_params(params, image_size):
    """One-time folding of all convs + BN layout helpers (static weights)."""
    folded = {}
    m, (oh, ow, oc) = expand_conv_weight(params["w_init"], image_size, image_size,
                                         stride=2, pad=1)
    folded["m_init"] = m
    folded["pyramid"] = []
    cur_h, cur_w = oh, ow
    for (w, gamma, beta) in params["pyramid"]:
        m, (oh, ow, oc) = expand_conv_weight(w, cur_h, cur_w, stride=2, pad=1)
        p = oh * ow * oc
        r = (np.arange(p)[:, None] % oc == np.arange(oc)[None, :]).astype(np.float32)
        folded["pyramid"].append({
            "m": m,
            "gamma": jnp.asarray(np.asarray(gamma, np.float32).reshape(1, -1)),
            "beta": jnp.asarray(np.asarray(beta, np.float32).reshape(1, -1)),
            "r": jnp.asarray(r),
            "rt": jnp.asarray(np.ascontiguousarray(r.T)),
            "ohw": oh * ow,
        })
        cur_h, cur_w = oh, ow
    m_final, _ = expand_conv_weight(params["w_final"], cur_h, cur_w, stride=1, pad=0)
    folded["m_final"] = m_final
    folded["feat_shape"] = (cur_h, cur_w, oc)   # (4, 4, last-channel-count)
    return folded


# ------------------------------- forward wrapper ------------------------------

def netd_forward(x, folded):
    n, c, hh, ww = x.shape
    # one tiny input layout change (NCHW -> channel-last flat); weights are
    # already folded, outputs come back lane-dense flat.
    x_flat = x.transpose(0, 2, 3, 1).reshape(n, hh * ww * c)

    inputs = [x_flat, folded["m_init"]]
    inv_counts = []
    for layer in folded["pyramid"]:
        inputs.extend([layer["m"], layer["gamma"], layer["beta"],
                       layer["r"], layer["rt"]])
        inv_counts.append(1.0 / float(n * layer["ohw"]))
    inputs.append(folded["m_final"])

    oh_f, ow_f, oc_f = folded["feat_shape"]
    feat_len = oh_f * ow_f * oc_f
    n_pyr = len(folded["pyramid"])

    kernel = functools.partial(_netd_fused_kernel, n_pyr=n_pyr,
                               inv_counts=tuple(inv_counts))

    # advisory cost estimate for the XLA scheduler
    flops = 2 * n * folded["m_init"].shape[0] * folded["m_init"].shape[1]
    for layer in folded["pyramid"]:
        p_in, p_out = layer["m"].shape
        c_out = layer["gamma"].shape[1]
        flops += 2 * n * p_in * p_out + 2 * 5 * p_out * c_out
    flops += 2 * n * folded["m_final"].shape[0]
    bytes_accessed = sum(int(a.size) * 4 for a in inputs) + (n * feat_len + n) * 4
    transcendentals = n + sum(int(l["gamma"].shape[1]) for l in folded["pyramid"])

    vmem = pl.BlockSpec(memory_space=pltpu.MemorySpace.VMEM)
    feat_flat, cls = pl.pallas_call(
        kernel,
        out_shape=(jax.ShapeDtypeStruct((n, feat_len), jnp.float32),
                   jax.ShapeDtypeStruct((n, 1), jnp.float32)),
        in_specs=[vmem] * len(inputs),
        out_specs=(vmem, vmem),
        cost_estimate=pl.CostEstimate(flops=int(flops),
                                      transcendentals=int(transcendentals),
                                      bytes_accessed=int(bytes_accessed)),
    )(*inputs)

    features = feat_flat.reshape(n, oh_f, ow_f, oc_f).transpose(0, 3, 1, 2)
    classifier = cls.reshape(-1)
    return classifier, features


# ----------------------------- pure-JAX reference -----------------------------

def netd_reference(x, params):
    def conv(z, w, s, p):
        return jax.lax.conv_general_dilated(
            z, w, (s, s), [(p, p), (p, p)],
            dimension_numbers=("NCHW", "OIHW", "NCHW"))

    h = conv(x, params["w_init"], 2, 1)
    h = jnp.where(h >= 0, h, 0.2 * h)
    for (w, g, b) in params["pyramid"]:
        h = conv(h, w, 2, 1)
        m = h.mean(axis=(0, 2, 3), keepdims=True)
        v = jnp.var(h, axis=(0, 2, 3), keepdims=True)
        h = (h - m) / jnp.sqrt(v + EPS) * g.reshape(1, -1, 1, 1) + b.reshape(1, -1, 1, 1)
        h = jnp.where(h >= 0, h, 0.2 * h)
    feats = h
    c = conv(h, params["w_final"], 1, 0)
    return jax.nn.sigmoid(c).reshape(-1), feats


# ----------------------------------- main --------------------------------------

def init_params(key, image_size, nc, ngf):
    assert image_size % 16 == 0
    keys = jax.random.split(key, 16)
    ki = 0

    def nrm(shape):
        nonlocal ki
        w = 0.02 * jax.random.normal(keys[ki], shape, dtype=jnp.float32)
        ki += 1
        return w

    params = {"w_init": nrm((ngf, nc, 4, 4)), "pyramid": []}
    csize, cndf = image_size // 2, ngf
    while csize > 4:
        params["pyramid"].append(
            (nrm((cndf * 2, cndf, 4, 4)),
             jnp.ones((cndf * 2,), jnp.float32),      # BN gamma (PyTorch init)
             jnp.zeros((cndf * 2,), jnp.float32)))    # BN beta
        cndf, csize = cndf * 2, csize // 2
    params["w_final"] = nrm((1, cndf, 4, 4))           # nz = 1 for NetD
    return params


if __name__ == "__main__":
    imageSize, nc, ngf, batch = 16, 4, 8, 2
    key = jax.random.PRNGKey(0)
    kx, kp = jax.random.split(key)
    x = jax.random.normal(kx, (batch, nc, imageSize, imageSize), dtype=jnp.float32)
    params = init_params(kp, imageSize, nc, ngf)
    folded = fold_params(params, imageSize)          # one-time weight folding

    classifier, features = jax.block_until_ready(netd_forward(x, folded))
    ref_cls, ref_feat = jax.block_until_ready(netd_reference(x, params))

    assert classifier.shape == (batch,), classifier.shape
    assert features.shape == (batch, ngf * 2, 4, 4), features.shape
    assert jnp.allclose(classifier, ref_cls, atol=1e-4, rtol=1e-4)
    assert jnp.allclose(features, ref_feat, atol=1e-4, rtol=1e-4)

    print("KERNEL_OK")
</pallas_src>

<mosaic_0001>
module attributes {stable_mosaic.version = 11 : i64} {
  func.func @_netd_fused_kernel(%arg0: memref<2x1024xf32, #tpu.memory_space<vmem>>, %arg1: memref<1024x512xf32, #tpu.memory_space<vmem>>, %arg2: memref<512x256xf32, #tpu.memory_space<vmem>>, %arg3: memref<1x16xf32, #tpu.memory_space<vmem>>, %arg4: memref<1x16xf32, #tpu.memory_space<vmem>>, %arg5: memref<256x16xf32, #tpu.memory_space<vmem>>, %arg6: memref<16x256xf32, #tpu.memory_space<vmem>>, %arg7: memref<256x1xf32, #tpu.memory_space<vmem>>, %arg8: memref<2x256xf32, #tpu.memory_space<vmem>>, %arg9: memref<2x1xf32, #tpu.memory_space<vmem>>) attributes {dimension_semantics = [], scalar_prefetch = 0 : i64, scratch_operands = 0 : i64, tpu.core_type = #tpu.core_type<tc>} {
    %c0 = arith.constant 0 : index
    %c0_0 = arith.constant 0 : index
    %0 = vector.load %arg0[%c0, %c0_0] : memref<2x1024xf32, #tpu.memory_space<vmem>>, vector<2x1024xf32>
    %c0_1 = arith.constant 0 : index
    %c0_2 = arith.constant 0 : index
    %1 = vector.load %arg1[%c0_1, %c0_2] : memref<1024x512xf32, #tpu.memory_space<vmem>>, vector<1024x512xf32>
    %cst = arith.constant dense<0.000000e+00> : vector<2x512xf32>
    %2 = tpu.matmul %0, %1, %cst {dimension_numbers = #tpu.dot_dimension_numbers<[1], [0], [0], [1], [0, 0, 1, 1], [], []>} : vector<2x1024xf32>, vector<1024x512xf32>, vector<2x512xf32> -> vector<2x512xf32>
    %cst_3 = arith.constant 0.000000e+00 : f32
    %3 = vector.broadcast %cst_3 : f32 to vector<2x512xf32>
    %4 = arith.cmpf oge, %2, %3 : vector<2x512xf32>
    %cst_4 = arith.constant 2.000000e-01 : f32
    %5 = vector.broadcast %cst_4 : f32 to vector<2x512xf32>
    %6 = arith.mulf %5, %2 : vector<2x512xf32>
    %7 = arith.select %4, %2, %6 : vector<2x512xi1>, vector<2x512xf32>
    %c0_5 = arith.constant 0 : index
    %c0_6 = arith.constant 0 : index
    %8 = vector.load %arg2[%c0_5, %c0_6] : memref<512x256xf32, #tpu.memory_space<vmem>>, vector<512x256xf32>
    %cst_7 = arith.constant dense<0.000000e+00> : vector<2x256xf32>
    %9 = tpu.matmul %7, %8, %cst_7 {dimension_numbers = #tpu.dot_dimension_numbers<[1], [0], [0], [1], [0, 0, 1, 1], [], []>} : vector<2x512xf32>, vector<512x256xf32>, vector<2x256xf32> -> vector<2x256xf32>
    %c0_8 = arith.constant 0 : index
    %c0_9 = arith.constant 0 : index
    %10 = vector.load %arg5[%c0_8, %c0_9] : memref<256x16xf32, #tpu.memory_space<vmem>>, vector<256x16xf32>
    %c0_10 = arith.constant 0 : index
    %c0_11 = arith.constant 0 : index
    %11 = vector.load %arg6[%c0_10, %c0_11] : memref<16x256xf32, #tpu.memory_space<vmem>>, vector<16x256xf32>
    %cst_12 = arith.constant dense<0.000000e+00> : vector<256xf32>
    %12 = vector.multi_reduction <add>, %9, %cst_12 [0] : vector<2x256xf32> to vector<256xf32>
    %13 = vector.shape_cast %12 : vector<256xf32> to vector<1x256xf32>
    %cst_13 = arith.constant dense<0.000000e+00> : vector<1x16xf32>
    %14 = tpu.matmul %13, %10, %cst_13 {dimension_numbers = #tpu.dot_dimension_numbers<[1], [0], [0], [1], [0, 0, 1, 1], [], []>} : vector<1x256xf32>, vector<256x16xf32>, vector<1x16xf32> -> vector<1x16xf32>
    %cst_14 = arith.constant 3.125000e-02 : f32
    %15 = vector.broadcast %cst_14 : f32 to vector<1x16xf32>
    %16 = arith.mulf %14, %15 : vector<1x16xf32>
    %cst_15 = arith.constant dense<0.000000e+00> : vector<1x256xf32>
    %17 = tpu.matmul %16, %11, %cst_15 {dimension_numbers = #tpu.dot_dimension_numbers<[1], [0], [0], [1], [0, 0, 1, 1], [], []>} : vector<1x16xf32>, vector<16x256xf32>, vector<1x256xf32> -> vector<1x256xf32>
    %18 = vector.broadcast %17 : vector<1x256xf32> to vector<2x256xf32>
    %19 = arith.subf %9, %18 : vector<2x256xf32>
    %20 = arith.mulf %19, %19 : vector<2x256xf32>
    %cst_16 = arith.constant dense<0.000000e+00> : vector<256xf32>
    %21 = vector.multi_reduction <add>, %20, %cst_16 [0] : vector<2x256xf32> to vector<256xf32>
    %22 = vector.shape_cast %21 : vector<256xf32> to vector<1x256xf32>
    %cst_17 = arith.constant dense<0.000000e+00> : vector<1x16xf32>
    %23 = tpu.matmul %22, %10, %cst_17 {dimension_numbers = #tpu.dot_dimension_numbers<[1], [0], [0], [1], [0, 0, 1, 1], [], []>} : vector<1x256xf32>, vector<256x16xf32>, vector<1x16xf32> -> vector<1x16xf32>
    %cst_18 = arith.constant 3.125000e-02 : f32
    %24 = vector.broadcast %cst_18 : f32 to vector<1x16xf32>
    %25 = arith.mulf %23, %24 : vector<1x16xf32>
    %c0_19 = arith.constant 0 : index
    %c0_20 = arith.constant 0 : index
    %26 = vector.load %arg3[%c0_19, %c0_20] : memref<1x16xf32, #tpu.memory_space<vmem>>, vector<1x16xf32>
    %cst_21 = arith.constant 9.99999974E-6 : f32
    %27 = vector.broadcast %cst_21 : f32 to vector<1x16xf32>
    %28 = arith.addf %25, %27 : vector<1x16xf32>
    %29 = math.rsqrt %28 : vector<1x16xf32>
    %30 = arith.mulf %26, %29 : vector<1x16xf32>
    %c0_22 = arith.constant 0 : index
    %c0_23 = arith.constant 0 : index
    %31 = vector.load %arg4[%c0_22, %c0_23] : memref<1x16xf32, #tpu.memory_space<vmem>>, vector<1x16xf32>
    %32 = arith.mulf %16, %30 : vector<1x16xf32>
    %33 = arith.subf %31, %32 : vector<1x16xf32>
    %cst_24 = arith.constant dense<0.000000e+00> : vector<1x256xf32>
    %34 = tpu.matmul %30, %11, %cst_24 {dimension_numbers = #tpu.dot_dimension_numbers<[1], [0], [0], [1], [0, 0, 1, 1], [], []>} : vector<1x16xf32>, vector<16x256xf32>, vector<1x256xf32> -> vector<1x256xf32>
    %cst_25 = arith.constant dense<0.000000e+00> : vector<1x256xf32>
    %35 = tpu.matmul %33, %11, %cst_25 {dimension_numbers = #tpu.dot_dimension_numbers<[1], [0], [0], [1], [0, 0, 1, 1], [], []>} : vector<1x16xf32>, vector<16x256xf32>, vector<1x256xf32> -> vector<1x256xf32>
    %36 = vector.broadcast %34 : vector<1x256xf32> to vector<2x256xf32>
    %37 = arith.mulf %9, %36 : vector<2x256xf32>
    %38 = vector.broadcast %35 : vector<1x256xf32> to vector<2x256xf32>
    %39 = arith.addf %37, %38 : vector<2x256xf32>
    %cst_26 = arith.constant 0.000000e+00 : f32
    %40 = vector.broadcast %cst_26 : f32 to vector<2x256xf32>
    %41 = arith.cmpf oge, %39, %40 : vector<2x256xf32>
    %cst_27 = arith.constant 2.000000e-01 : f32
    %42 = vector.broadcast %cst_27 : f32 to vector<2x256xf32>
    %43 = arith.mulf %42, %39 : vector<2x256xf32>
    %44 = arith.select %41, %39, %43 : vector<2x256xi1>, vector<2x256xf32>
    %c0_28 = arith.constant 0 : index
    %c0_29 = arith.constant 0 : index
    %45 = vector.load %arg8[%c0_28, %c0_29] : memref<2x256xf32, #tpu.memory_space<vmem>>, vector<2x256xf32>
    tpu.vector_store %arg8[%c0_28, %c0_29], %44 {strides = array<i32>} : memref<2x256xf32, #tpu.memory_space<vmem>>, vector<2x256xf32>,
    %c0_30 = arith.constant 0 : index
    %c0_31 = arith.constant 0 : index
    %46 = vector.load %arg7[%c0_30, %c0_31] : memref<256x1xf32, #tpu.memory_space<vmem>>, vector<256x1xf32>
    %cst_32 = arith.constant dense<0.000000e+00> : vector<2x1xf32>
    %47 = tpu.matmul %44, %46, %cst_32 {dimension_numbers = #tpu.dot_dimension_numbers<[1], [0], [0], [1], [0, 0, 1, 1], [], []>} : vector<2x256xf32>, vector<256x1xf32>, vector<2x1xf32> -> vector<2x1xf32>
    %48 = arith.negf %47 : vector<2x1xf32>
    %49 = math.exp %48 : vector<2x1xf32>
    %cst_33 = arith.constant 1.000000e+00 : f32
    %50 = vector.broadcast %cst_33 : f32 to vector<2x1xf32>
    %51 = arith.addf %50, %49 : vector<2x1xf32>
    %52 = arith.divf %50, %51 : vector<2x1xf32>
    %c0_34 = arith.constant 0 : index
    %c0_35 = arith.constant 0 : index
    %53 = vector.load %arg9[%c0_34, %c0_35] : memref<2x1xf32, #tpu.memory_space<vmem>>, vector<2x1xf32>
    tpu.vector_store %arg9[%c0_34, %c0_35], %52 {strides = array<i32>} : memref<2x1xf32, #tpu.memory_space<vmem>>, vector<2x1xf32>,
    return
  }
}

</mosaic_0001>

<llo_original>
// kernel: tpu_custom_call.1
$region0: #{tpu_custom_call.1}
  #allocation0 [shape = 'u32[]', space=smem, size = 0x4, offset = 0x4, fixed_abs, tag = 'smem constant byte address 0x4 - core index']
  #allocation1 [shape = 'u32[144,128]{1,0:T(1,128)}', space=vmem, size = 0x12000, scoped, tag = 'internal scratch']
  %s0 = inlined_call_operand.hbm [shape: f32[2,1024], index: 0, kind: input, shape index: {}]
  %s1 = inlined_call_operand.hbm [shape: f32[1024,512], index: 1, kind: input, shape index: {}]
  %s2 = inlined_call_operand.hbm [shape: f32[512,256], index: 2, kind: input, shape index: {}]
  %s3 = inlined_call_operand.hbm [shape: f32[1,16], index: 3, kind: input, shape index: {}]
  %s4 = inlined_call_operand.hbm [shape: f32[1,16], index: 4, kind: input, shape index: {}]
  %s5 = inlined_call_operand.vmem [shape: f32[256,16], index: 5, kind: input, shape index: {}]
  %s6 = inlined_call_operand.hbm [shape: f32[16,256], index: 6, kind: input, shape index: {}]
  %s7 = inlined_call_operand.vmem [shape: f32[256,1], index: 7, kind: input, shape index: {}]
  %s8 = inlined_call_operand.hbm [shape: f32[2,256], index: 8, kind: output, shape index: {0}]
  %s9 = inlined_call_operand.vmem [shape: f32[2,1], index: 9, kind: output, shape index: {1}]
  %10 = xla_tuple %s8, %s9
  %s11 = sld [smem:[#allocation0]]
  $region74: #{tpu_custom_call.1} parent=0
    _
  %s13 = ssub.s32 1, %s11
  %s14 = scalar_select 0, %s13, %s11
  $region1: #{tpu_custom_call.1} parent=0
    #allocation2 [shape = 'u8[8192]{0}', space=vmem, size = 0x2000, scoped, tag = 'input window, operand 0, single buffered']
    #allocation3 [shape = 's32[1]{0}', space=sflag, size = 0x4, scoped, tag = 'scoped memory for tpu_custom_call.1']
    #allocation4 [shape = 's32[1]{0}', space=sflag, size = 0x4, scoped, tag = 'scoped memory for tpu_custom_call.1']
    #allocation5 [shape = 'u8[2097152]{0}', space=vmem, size = 0x200000, scoped, tag = 'input window, operand 1, single buffered']
    #allocation6 [shape = 's32[1]{0}', space=sflag, size = 0x4, scoped, tag = 'scoped memory for tpu_custom_call.1']
    #allocation7 [shape = 'u8[524288]{0}', space=vmem, size = 0x80000, scoped, tag = 'input window, operand 2, single buffered']
    #allocation8 [shape = 'u8[512]{0}', space=vmem, size = 0x400, scoped, tag = 'input window, operand 3, single buffered']
    #allocation9 [shape = 's32[1]{0}', space=sflag, size = 0x4, scoped, tag = 'scoped memory for tpu_custom_call.1']
    #allocation10 [shape = 'u8[512]{0}', space=vmem, size = 0x400, scoped, tag = 'input window, operand 4, single buffered']
    #allocation11 [shape = 'u8[16384]{0}', space=vmem, size = 0x4000, scoped, tag = 'input window, operand 6, single buffered']
    #allocation12 [shape = 's32[1]{0}', space=sflag, size = 0x4, scoped, tag = 'scoped memory for tpu_custom_call.1']
    #allocation13 [shape = 'u8[2048]{0}', space=vmem, size = 0x800, scoped, tag = 'output window, operand 0, single buffered']
    %15 = vsyncpa [#allocation3], 0
    %16 = vsyncpa [#allocation6], 0
    %17 = vsyncpa [#allocation9], 0
    %18 = vsyncpa [#allocation12], 0
    %19 = vsyncpa [#allocation4], 0
    // Predicated region
    $region2: #{tpu_custom_call.1} parent=1 // pred_check
      _
    $region3: #{tpu_custom_call.1} parent=1 // pred_check_branch
      %21 = sbr.rel (0) target = $region5
    $region4: #{tpu_custom_call.1} parent=1 // pred_region
      %s23 = ssub.s32 256, 256
      %24 = vsyncadd [#allocation3], %s23
      %s26 = sshll.u32 [#allocation2], 4
      %s27 = int_to_ptr.vmem [resolvable:$true] %s26
      %29 = dma.hbm_to_vmem [thread:$0]  %s0, 256, %s27, [#allocation3]
    $region5: #{tpu_custom_call.1} parent=1 // pred_fallthru
      _
    // Predicated region
    $region6: #{tpu_custom_call.1} parent=1 // pred_check
      _
    $region7: #{tpu_custom_call.1} parent=1 // pred_check_branch
      %31 = sbr.rel (0) target = $region9
    $region8: #{tpu_custom_call.1} parent=1 // pred_region
      %s33 = ssub.s32 65536, 65536
      %34 = vsyncadd [#allocation6], %s33
      %s35 = sshll.u32 [#allocation5], 4
      %s36 = int_to_ptr.vmem [resolvable:$true] %s35
      %41 = dma.hbm_to_vmem [thread:$0]  %s1, 65536, %s36, [#allocation6], 512, 512, 32
    $region9: #{tpu_custom_call.1} parent=1 // pred_fallthru
      _
    // Predicated region
    $region10: #{tpu_custom_call.1} parent=1 // pred_check
      _
    $region11: #{tpu_custom_call.1} parent=1 // pred_check_branch
      %43 = sbr.rel (0) target = $region13
    $region12: #{tpu_custom_call.1} parent=1 // pred_region
      %s45 = ssub.s32 16384, 16384
      %46 = vsyncadd [#allocation6], %s45
      %s47 = sshll.u32 [#allocation7], 4
      %s48 = int_to_ptr.vmem [resolvable:$true] %s47
      %53 = dma.hbm_to_vmem [thread:$0]  %s2, 16384, %s48, [#allocation6], 256, 256, 16
    $region13: #{tpu_custom_call.1} parent=1 // pred_fallthru
      _
    // Predicated region
    $region14: #{tpu_custom_call.1} parent=1 // pred_check
      _
    $region15: #{tpu_custom_call.1} parent=1 // pred_check_branch
      %55 = sbr.rel (0) target = $region17
    $region16: #{tpu_custom_call.1} parent=1 // pred_region
      %s57 = ssub.s32 16, 16
      %58 = vsyncadd [#allocation9], %s57
      %s60 = sshll.u32 [#allocation8], 4
      %s61 = int_to_ptr.vmem [resolvable:$true] %s60
      %63 = dma.hbm_to_vmem [thread:$0]  %s3, 16, %s61, [#allocation9]
    $region17: #{tpu_custom_call.1} parent=1 // pred_fallthru
      _
    // Predicated region
    $region18: #{tpu_custom_call.1} parent=1 // pred_check
      _
    $region19: #{tpu_custom_call.1} parent=1 // pred_check_branch
      %65 = sbr.rel (0) target = $region21
    $region20: #{tpu_custom_call.1} parent=1 // pred_region
      %s67 = ssub.s32 16, 16
      %68 = vsyncadd [#allocation9], %s67
      %s70 = sshll.u32 [#allocation10], 4
      %s71 = int_to_ptr.vmem [resolvable:$true] %s70
      %73 = dma.hbm_to_vmem [thread:$0]  %s4, 16, %s71, [#allocation9]
    $region21: #{tpu_custom_call.1} parent=1 // pred_fallthru
      _
    // Predicated region
    $region22: #{tpu_custom_call.1} parent=1 // pred_check
      _
    $region23: #{tpu_custom_call.1} parent=1 // pred_check_branch
      %75 = sbr.rel (0) target = $region25
    $region24: #{tpu_custom_call.1} parent=1 // pred_region
      _
    $region25: #{tpu_custom_call.1} parent=1 // pred_fallthru
      _
    // Predicated region
    $region26: #{tpu_custom_call.1} parent=1 // pred_check
      _
    $region27: #{tpu_custom_call.1} parent=1 // pred_check_branch
      %77 = sbr.rel (0) target = $region29
    $region28: #{tpu_custom_call.1} parent=1 // pred_region
      %s79 = ssub.s32 512, 512
      %80 = vsyncadd [#allocation12], %s79
      %s81 = sshll.u32 [#allocation11], 4
      %s82 = int_to_ptr.vmem [resolvable:$true] %s81
      %87 = dma.hbm_to_vmem [thread:$0]  %s6, 512, %s82, [#allocation12], 256, 256, 16
    $region29: #{tpu_custom_call.1} parent=1 // pred_fallthru
      _
    // Predicated region
    $region30: #{tpu_custom_call.1} parent=1 // pred_check
      _
    $region31: #{tpu_custom_call.1} parent=1 // pred_check_branch
      %89 = sbr.rel (0) target = $region33
    $region32: #{tpu_custom_call.1} parent=1 // pred_region
      _
    $region33: #{tpu_custom_call.1} parent=1 // pred_fallthru
      _
    // Predicated region
    $region34: #{tpu_custom_call.1} parent=1 // pred_check
      _
    $region35: #{tpu_custom_call.1} parent=1 // pred_check_branch
      %91 = sbr.rel (0) target = $region37
    $region36: #{tpu_custom_call.1} parent=1 // pred_region
      %92 = dma.done [#allocation3], 256
    $region37: #{tpu_custom_call.1} parent=1 // pred_fallthru
      _
    // Predicated region
    $region38: #{tpu_custom_call.1} parent=1 // pred_check
      _
    $region39: #{tpu_custom_call.1} parent=1 // pred_check_branch
      %94 = sbr.rel (0) target = $region41
    $region40: #{tpu_custom_call.1} parent=1 // pred_region
      %95 = dma.done [#allocation6], 65536
    $region41: #{tpu_custom_call.1} parent=1 // pred_fallthru
      _
    // Predicated region
    $region42: #{tpu_custom_call.1} parent=1 // pred_check
      _
    $region43: #{tpu_custom_call.1} parent=1 // pred_check_branch
      %97 = sbr.rel (0) target = $region45
    $region44: #{tpu_custom_call.1} parent=1 // pred_region
      %98 = dma.done [#allocation6], 16384
    $region45: #{tpu_custom_call.1} parent=1 // pred_fallthru
      _
    // Predicated region
    $region46: #{tpu_custom_call.1} parent=1 // pred_check
      _
    $region47: #{tpu_custom_call.1} parent=1 // pred_check_branch
      %100 = sbr.rel (0) target = $region49
    $region48: #{tpu_custom_call.1} parent=1 // pred_region
      %101 = dma.done [#allocation9], 16
    $region49: #{tpu_custom_call.1} parent=1 // pred_fallthru
      _
    // Predicated region
    $region50: #{tpu_custom_call.1} parent=1 // pred_check
      _
    $region51: #{tpu_custom_call.1} parent=1 // pred_check_branch
      %103 = sbr.rel (0) target = $region53
    $region52: #{tpu_custom_call.1} parent=1 // pred_region
      %104 = dma.done [#allocation9], 16
    $region53: #{tpu_custom_call.1} parent=1 // pred_fallthru
      _
    // Predicated region
    $region54: #{tpu_custom_call.1} parent=1 // pred_check
      _
    $region55: #{tpu_custom_call.1} parent=1 // pred_check_branch
      %106 = sbr.rel (0) target = $region57
    $region56: #{tpu_custom_call.1} parent=1 // pred_region
      %107 = dma.done [#allocation12], 512
    $region57: #{tpu_custom_call.1} parent=1 // pred_fallthru
      _
    %v108 = vld [vmem:[#allocation2] sm:$0xff]
    %v109 = vld [vmem:[#allocation2 + $0x8] sm:$0xff]
    %v110 = vld [vmem:[#allocation5] sm:$0xff]
    %v111 = vld [vmem:[#allocation5 + $0x8] sm:$0xff]
    %v112 = vld [vmem:[#allocation5 + $0x10] sm:$0xff]
    %v113 = vld [vmem:[#allocation5 + $0x18] sm:$0xff]
    %v114 = vld [vmem:[#allocation5 + $0x20] sm:$0xff]
    %v115 = vld [vmem:[#allocation5 + $0x28] sm:$0xff]
    %v116 = vld [vmem:[#allocation5 + $0x30] sm:$0xff]
    %v117 = vld [vmem:[#allocation5 + $0x38] sm:$0xff]
    %v118 = vld [vmem:[#allocation5 + $0x40] sm:$0xff]
    %v119 = vld [vmem:[#allocation5 + $0x48] sm:$0xff]
    %v120 = vld [vmem:[#allocation5 + $0x50] sm:$0xff]
    %v121 = vld [vmem:[#allocation5 + $0x58] sm:$0xff]
    %v122 = vld [vmem:[#allocation5 + $0x60] sm:$0xff]
    %v123 = vld [vmem:[#allocation5 + $0x68] sm:$0xff]
    %v124 = vld [vmem:[#allocation5 + $0x70] sm:$0xff]
    %v125 = vld [vmem:[#allocation5 + $0x78] sm:$0xff]
    %v126 = vld [vmem:[#allocation5 + $0x80] sm:$0xff]
    %v127 = vld [vmem:[#allocation5 + $0x88] sm:$0xff]
    %v128 = vld [vmem:[#allocation5 + $0x90] sm:$0xff]
    %v129 = vld [vmem:[#allocation5 + $0x98] sm:$0xff]
    %v130 = vld [vmem:[#allocation5 + $0xa0] sm:$0xff]
    %v131 = vld [vmem:[#allocation5 + $0xa8] sm:$0xff]
    %v132 = vld [vmem:[#allocation5 + $0xb0] sm:$0xff]
    %v133 = vld [vmem:[#allocation5 + $0xb8] sm:$0xff]
    %v134 = vld [vmem:[#allocation5 + $0xc0] sm:$0xff]
    %v135 = vld [vmem:[#allocation5 + $0xc8] sm:$0xff]
    %v136 = vld [vmem:[#allocation5 + $0xd0] sm:$0xff]
    %v137 = vld [vmem:[#allocation5 + $0xd8] sm:$0xff]
    %v138 = vld [vmem:[#allocation5 + $0xe0] sm:$0xff]
    %v139 = vld [vmem:[#allocation5 + $0xe8] sm:$0xff]
    %v140 = vld [vmem:[#allocation5 + $0xf0] sm:$0xff]
    %v141 = vld [vmem:[#allocation5 + $0xf8] sm:$0xff]
    %v142 = vld [vmem:[#allocation5 + $0x100] sm:$0xff]
    %v143 = vld [vmem:[#allocation5 + $0x108] sm:$0xff]
    %v144 = vld [vmem:[#allocation5 + $0x110] sm:$0xff]
    %v145 = vld [vmem:[#allocation5 + $0x118] sm:$0xff]
    %v146 = vld [vmem:[#allocation5 + $0x120] sm:$0xff]
    %v147 = vld [vmem:[#allocation5 + $0x128] sm:$0xff]
    %v148 = vld [vmem:[#allocation5 + $0x130] sm:$0xff]
    %v149 = vld [vmem:[#allocation5 + $0x138] sm:$0xff]
    %v150 = vld [vmem:[#allocation5 + $0x140] sm:$0xff]
    %v151 = vld [vmem:[#allocation5 + $0x148] sm:$0xff]
    %v152 = vld [vmem:[#allocation5 + $0x150] sm:$0xff]
    %v153 = vld [vmem:[#allocation5 + $0x158] sm:$0xff]
    %v154 = vld [vmem:[#allocation5 + $0x160] sm:$0xff]
    %v155 = vld [vmem:[#allocation5 + $0x168] sm:$0xff]
    %v156 = vld [vmem:[#allocation5 + $0x170] sm:$0xff]
    %v157 = vld [vmem:[#allocation5 + $0x178] sm:$0xff]
    %v158 = vld [vmem:[#allocation5 + $0x180] sm:$0xff]
    %v159 = vld [vmem:[#allocation5 + $0x188] sm:$0xff]
    %v160 = vld [vmem:[#allocation5 + $0x190] sm:$0xff]
    %v161 = vld [vmem:[#allocation5 + $0x198] sm:$0xff]
    %v162 = vld [vmem:[#allocation5 + $0x1a0] sm:$0xff]
    %v163 = vld [vmem:[#allocation5 + $0x1a8] sm:$0xff]
    %v164 = vld [vmem:[#allocation5 + $0x1b0] sm:$0xff]
    %v165 = vld [vmem:[#allocation5 + $0x1b8] sm:$0xff]
    %v166 = vld [vmem:[#allocation5 + $0x1c0] sm:$0xff]
    %v167 = vld [vmem:[#allocation5 + $0x1c8] sm:$0xff]
    %v168 = vld [vmem:[#allocation5 + $0x1d0] sm:$0xff]
    %v169 = vld [vmem:[#allocation5 + $0x1d8] sm:$0xff]
    %v170 = vld [vmem:[#allocation5 + $0x1e0] sm:$0xff]
    %v171 = vld [vmem:[#allocation5 + $0x1e8] sm:$0xff]
    %v172 = vld [vmem:[#allocation5 + $0x1f0] sm:$0xff]
    %v173 = vld [vmem:[#allocation5 + $0x1f8] sm:$0xff]
    %v174 = vld [vmem:[#allocation5 + $0x200] sm:$0xff]
    %v175 = vld [vmem:[#allocation5 + $0x208] sm:$0xff]
    %v176 = vld [vmem:[#allocation5 + $0x210] sm:$0xff]
    %v177 = vld [vmem:[#allocation5 + $0x218] sm:$0xff]
    %v178 = vld [vmem:[#allocation5 + $0x220] sm:$0xff]
    %v179 = vld [vmem:[#allocation5 + $0x228] sm:$0xff]
    %v180 = vld [vmem:[#allocation5 + $0x230] sm:$0xff]
    %v181 = vld [vmem:[#allocation5 + $0x238] sm:$0xff]
    %v182 = vld [vmem:[#allocation5 + $0x240] sm:$0xff]
    %v183 = vld [vmem:[#allocation5 + $0x248] sm:$0xff]
    %v184 = vld [vmem:[#allocation5 + $0x250] sm:$0xff]
    %v185 = vld [vmem:[#allocation5 + $0x258] sm:$0xff]
    %v186 = vld [vmem:[#allocation5 + $0x260] sm:$0xff]
    %v187 = vld [vmem:[#allocation5 + $0x268] sm:$0xff]
    %v188 = vld [vmem:[#allocation5 + $0x270] sm:$0xff]
    %v189 = vld [vmem:[#allocation5 + $0x278] sm:$0xff]
    %v190 = vld [vmem:[#allocation5 + $0x280] sm:$0xff]
    %v191 = vld [vmem:[#allocation5 + $0x288] sm:$0xff]
    %v192 = vld [vmem:[#allocation5 + $0x290] sm:$0xff]
    %v193 = vld [vmem:[#allocation5 + $0x298] sm:$0xff]
    %v194 = vld [vmem:[#allocation5 + $0x2a0] sm:$0xff]
    %v195 = vld [vmem:[#allocation5 + $0x2a8] sm:$0xff]
    %v196 = vld [vmem:[#allocation5 + $0x2b0] sm:$0xff]
    %v197 = vld [vmem:[#allocation5 + $0x2b8] sm:$0xff]
    %v198 = vld [vmem:[#allocation5 + $0x2c0] sm:$0xff]
    %v199 = vld [vmem:[#allocation5 + $0x2c8] sm:$0xff]
    %v200 = vld [vmem:[#allocation5 + $0x2d0] sm:$0xff]
    %v201 = vld [vmem:[#allocation5 + $0x2d8] sm:$0xff]
    %v202 = vld [vmem:[#allocation5 + $0x2e0] sm:$0xff]
    %v203 = vld [vmem:[#allocation5 + $0x2e8] sm:$0xff]
    %v204 = vld [vmem:[#allocation5 + $0x2f0] sm:$0xff]
    %v205 = vld [vmem:[#allocation5 + $0x2f8] sm:$0xff]
    %v206 = vld [vmem:[#allocation5 + $0x300] sm:$0xff]
    %v207 = vld [vmem:[#allocation5 + $0x308] sm:$0xff]
    %v208 = vld [vmem:[#allocation5 + $0x310] sm:$0xff]
    %v209 = vld [vmem:[#allocation5 + $0x318] sm:$0xff]
    %v210 = vld [vmem:[#allocation5 + $0x320] sm:$0xff]
    %v211 = vld [vmem:[#allocation5 + $0x328] sm:$0xff]
    %v212 = vld [vmem:[#allocation5 + $0x330] sm:$0xff]
    %v213 = vld [vmem:[#allocation5 + $0x338] sm:$0xff]
    %v214 = vld [vmem:[#allocation5 + $0x340] sm:$0xff]
    %v215 = vld [vmem:[#allocation5 + $0x348] sm:$0xff]
    %v216 = vld [vmem:[#allocation5 + $0x350] sm:$0xff]
    %v217 = vld [vmem:[#allocation5 + $0x358] sm:$0xff]
    %v218 = vld [vmem:[#allocation5 + $0x360] sm:$0xff]
    %v219 = vld [vmem:[#allocation5 + $0x368] sm:$0xff]
    %v220 = vld [vmem:[#allocation5 + $0x370] sm:$0xff]
    %v221 = vld [vmem:[#allocation5 + $0x378] sm:$0xff]
    %v222 = vld [vmem:[#allocation5 + $0x380] sm:$0xff]
    %v223 = vld [vmem:[#allocation5 + $0x388] sm:$0xff]
    %v224 = vld [vmem:[#allocation5 + $0x390] sm:$0xff]
    %v225 = vld [vmem:[#allocation5 + $0x398] sm:$0xff]
    %v226 = vld [vmem:[#allocation5 + $0x3a0] sm:$0xff]
    %v227 = vld [vmem:[#allocation5 + $0x3a8] sm:$0xff]
    %v228 = vld [vmem:[#allocation5 + $0x3b0] sm:$0xff]
    %v229 = vld [vmem:[#allocation5 + $0x3b8] sm:$0xff]
    %v230 = vld [vmem:[#allocation5 + $0x3c0] sm:$0xff]
    %v231 = vld [vmem:[#allocation5 + $0x3c8] sm:$0xff]
    %v232 = vld [vmem:[#allocation5 + $0x3d0] sm:$0xff]
    %v233 = vld [vmem:[#allocation5 + $0x3d8] sm:$0xff]
    %v234 = vld [vmem:[#allocation5 + $0x3e0] sm:$0xff]
    %v235 = vld [vmem:[#allocation5 + $0x3e8] sm:$0xff]
    %v236 = vld [vmem:[#allocation5 + $0x3f0] sm:$0xff]
    %v237 = vld [vmem:[#allocation5 + $0x3f8] sm:$0xff]
    %v238 = vld [vmem:[#allocation5 + $0x400] sm:$0xff]
    %v239 = vld [vmem:[#allocation5 + $0x408] sm:$0xff]
    %v240 = vld [vmem:[#allocation5 + $0x410] sm:$0xff]
    %v241 = vld [vmem:[#allocation5 + $0x418] sm:$0xff]
    %v242 = vld [vmem:[#allocation5 + $0x420] sm:$0xff]
    %v243 = vld [vmem:[#allocation5 + $0x428] sm:$0xff]
    %v244 = vld [vmem:[#allocation5 + $0x430] sm:$0xff]
    %v245 = vld [vmem:[#allocation5 + $0x438] sm:$0xff]
    %v246 = vld [vmem:[#allocation5 + $0x440] sm:$0xff]
    %v247 = vld [vmem:[#allocation5 + $0x448] sm:$0xff]
    %v248 = vld [vmem:[#allocation5 + $0x450] sm:$0xff]
    %v249 = vld [vmem:[#allocation5 + $0x458] sm:$0xff]
    %v250 = vld [vmem:[#allocation5 + $0x460] sm:$0xff]
    %v251 = vld [vmem:[#allocation5 + $0x468] sm:$0xff]
    %v252 = vld [vmem:[#allocation5 + $0x470] sm:$0xff]
    %v253 = vld [vmem:[#allocation5 + $0x478] sm:$0xff]
    %v254 = vld [vmem:[#allocation5 + $0x480] sm:$0xff]
    %v255 = vld [vmem:[#allocation5 + $0x488] sm:$0xff]
    %v256 = vld [vmem:[#allocation5 + $0x490] sm:$0xff]
    %v257 = vld [vmem:[#allocation5 + $0x498] sm:$0xff]
    %v258 = vld [vmem:[#allocation5 + $0x4a0] sm:$0xff]
    %v259 = vld [vmem:[#allocation5 + $0x4a8] sm:$0xff]
    %v260 = vld [vmem:[#allocation5 + $0x4b0] sm:$0xff]
    %v261 = vld [vmem:[#allocation5 + $0x4b8] sm:$0xff]
    %v262 = vld [vmem:[#allocation5 + $0x4c0] sm:$0xff]
    %v263 = vld [vmem:[#allocation5 + $0x4c8] sm:$0xff]
    %v264 = vld [vmem:[#allocation5 + $0x4d0] sm:$0xff]
    %v265 = vld [vmem:[#allocation5 + $0x4d8] sm:$0xff]
    %v266 = vld [vmem:[#allocation5 + $0x4e0] sm:$0xff]
    %v267 = vld [vmem:[#allocation5 + $0x4e8] sm:$0xff]
    %v268 = vld [vmem:[#allocation5 + $0x4f0] sm:$0xff]
    %v269 = vld [vmem:[#allocation5 + $0x4f8] sm:$0xff]
    %v270 = vld [vmem:[#allocation5 + $0x500] sm:$0xff]
    %v271 = vld [vmem:[#allocation5 + $0x508] sm:$0xff]
    %v272 = vld [vmem:[#allocation5 + $0x510] sm:$0xff]
    %v273 = vld [vmem:[#allocation5 + $0x518] sm:$0xff]
    %v274 = vld [vmem:[#allocation5 + $0x520] sm:$0xff]
    %v275 = vld [vmem:[#allocation5 + $0x528] sm:$0xff]
    %v276 = vld [vmem:[#allocation5 + $0x530] sm:$0xff]
    %v277 = vld [vmem:[#allocation5 + $0x538] sm:$0xff]
    %v278 = vld [vmem:[#allocation5 + $0x540] sm:$0xff]
    %v279 = vld [vmem:[#allocation5 + $0x548] sm:$0xff]
    %v280 = vld [vmem:[#allocation5 + $0x550] sm:$0xff]
    %v281 = vld [vmem:[#allocation5 + $0x558] sm:$0xff]
    %v282 = vld [vmem:[#allocation5 + $0x560] sm:$0xff]
    %v283 = vld [vmem:[#allocation5 + $0x568] sm:$0xff]
    %v284 = vld [vmem:[#allocation5 + $0x570] sm:$0xff]
    %v285 = vld [vmem:[#allocation5 + $0x578] sm:$0xff]
    %v286 = vld [vmem:[#allocation5 + $0x580] sm:$0xff]
    %v287 = vld [vmem:[#allocation5 + $0x588] sm:$0xff]
    %v288 = vld [vmem:[#allocation5 + $0x590] sm:$0xff]
    %v289 = vld [vmem:[#allocation5 + $0x598] sm:$0xff]
    %v290 = vld [vmem:[#allocation5 + $0x5a0] sm:$0xff]
    %v291 = vld [vmem:[#allocation5 + $0x5a8] sm:$0xff]
    %v292 = vld [vmem:[#allocation5 + $0x5b0] sm:$0xff]
    %v293 = vld [vmem:[#allocation5 + $0x5b8] sm:$0xff]
    %v294 = vld [vmem:[#allocation5 + $0x5c0] sm:$0xff]
    %v295 = vld [vmem:[#allocation5 + $0x5c8] sm:$0xff]
    %v296 = vld [vmem:[#allocation5 + $0x5d0] sm:$0xff]
    %v297 = vld [vmem:[#allocation5 + $0x5d8] sm:$0xff]
    %v298 = vld [vmem:[#allocation5 + $0x5e0] sm:$0xff]
    %v299 = vld [vmem:[#allocation5 + $0x5e8] sm:$0xff]
    %v300 = vld [vmem:[#allocation5 + $0x5f0] sm:$0xff]
    %v301 = vld [vmem:[#allocation5 + $0x5f8] sm:$0xff]
    %v302 = vld [vmem:[#allocation5 + $0x600] sm:$0xff]
    %v303 = vld [vmem:[#allocation5 + $0x608] sm:$0xff]
    %v304 = vld [vmem:[#allocation5 + $0x610] sm:$0xff]
    %v305 = vld [vmem:[#allocation5 + $0x618] sm:$0xff]
    %v306 = vld [vmem:[#allocation5 + $0x620] sm:$0xff]
    %v307 = vld [vmem:[#allocation5 + $0x628] sm:$0xff]
    %v308 = vld [vmem:[#allocation5 + $0x630] sm:$0xff]
    %v309 = vld [vmem:[#allocation5 + $0x638] sm:$0xff]
    %v310 = vld [vmem:[#allocation5 + $0x640] sm:$0xff]
    %v311 = vld [vmem:[#allocation5 + $0x648] sm:$0xff]
    %v312 = vld [vmem:[#allocation5 + $0x650] sm:$0xff]
    %v313 = vld [vmem:[#allocation5 + $0x658] sm:$0xff]
    %v314 = vld [vmem:[#allocation5 + $0x660] sm:$0xff]
    %v315 = vld [vmem:[#allocation5 + $0x668] sm:$0xff]
    %v316 = vld [vmem:[#allocation5 + $0x670] sm:$0xff]
    %v317 = vld [vmem:[#allocation5 + $0x678] sm:$0xff]
    %v318 = vld [vmem:[#allocation5 + $0x680] sm:$0xff]
    %v319 = vld [vmem:[#allocation5 + $0x688] sm:$0xff]
    %v320 = vld [vmem:[#allocation5 + $0x690] sm:$0xff]
    %v321 = vld [vmem:[#allocation5 + $0x698] sm:$0xff]
    %v322 = vld [vmem:[#allocation5 + $0x6a0] sm:$0xff]
    %v323 = vld [vmem:[#allocation5 + $0x6a8] sm:$0xff]
    %v324 = vld [vmem:[#allocation5 + $0x6b0] sm:$0xff]
    %v325 = vld [vmem:[#allocation5 + $0x6b8] sm:$0xff]
    %v326 = vld [vmem:[#allocation5 + $0x6c0] sm:$0xff]
    %v327 = vld [vmem:[#allocation5 + $0x6c8] sm:$0xff]
    %v328 = vld [vmem:[#allocation5 + $0x6d0] sm:$0xff]
    %v329 = vld [vmem:[#allocation5 + $0x6d8] sm:$0xff]
    %v330 = vld [vmem:[#allocation5 + $0x6e0] sm:$0xff]
    %v331 = vld [vmem:[#allocation5 + $0x6e8] sm:$0xff]
    %v332 = vld [vmem:[#allocation5 + $0x6f0] sm:$0xff]
    %v333 = vld [vmem:[#allocation5 + $0x6f8] sm:$0xff]
    %v334 = vld [vmem:[#allocation5 + $0x700] sm:$0xff]
    %v335 = vld [vmem:[#allocation5 + $0x708] sm:$0xff]
    %v336 = vld [vmem:[#allocation5 + $0x710] sm:$0xff]
    %v337 = vld [vmem:[#allocation5 + $0x718] sm:$0xff]
    %v338 = vld [vmem:[#allocation5 + $0x720] sm:$0xff]
    %v339 = vld [vmem:[#allocation5 + $0x728] sm:$0xff]
    %v340 = vld [vmem:[#allocation5 + $0x730] sm:$0xff]
    %v341 = vld [vmem:[#allocation5 + $0x738] sm:$0xff]
    %v342 = vld [vmem:[#allocation5 + $0x740] sm:$0xff]
    %v343 = vld [vmem:[#allocation5 + $0x748] sm:$0xff]
    %v344 = vld [vmem:[#allocation5 + $0x750] sm:$0xff]
    %v345 = vld [vmem:[#allocation5 + $0x758] sm:$0xff]
    %v346 = vld [vmem:[#allocation5 + $0x760] sm:$0xff]
    %v347 = vld [vmem:[#allocation5 + $0x768] sm:$0xff]
    %v348 = vld [vmem:[#allocation5 + $0x770] sm:$0xff]
    %v349 = vld [vmem:[#allocation5 + $0x778] sm:$0xff]
    %v350 = vld [vmem:[#allocation5 + $0x780] sm:$0xff]
    %v351 = vld [vmem:[#allocation5 + $0x788] sm:$0xff]
    %v352 = vld [vmem:[#allocation5 + $0x790] sm:$0xff]
    %v353 = vld [vmem:[#allocation5 + $0x798] sm:$0xff]
    %v354 = vld [vmem:[#allocation5 + $0x7a0] sm:$0xff]
    %v355 = vld [vmem:[#allocation5 + $0x7a8] sm:$0xff]
    %v356 = vld [vmem:[#allocation5 + $0x7b0] sm:$0xff]
    %v357 = vld [vmem:[#allocation5 + $0x7b8] sm:$0xff]
    %v358 = vld [vmem:[#allocation5 + $0x7c0] sm:$0xff]
    %v359 = vld [vmem:[#allocation5 + $0x7c8] sm:$0xff]
    %v360 = vld [vmem:[#allocation5 + $0x7d0] sm:$0xff]
    %v361 = vld [vmem:[#allocation5 + $0x7d8] sm:$0xff]
    %v362 = vld [vmem:[#allocation5 + $0x7e0] sm:$0xff]
    %v363 = vld [vmem:[#allocation5 + $0x7e8] sm:$0xff]
    %v364 = vld [vmem:[#allocation5 + $0x7f0] sm:$0xff]
    %v365 = vld [vmem:[#allocation5 + $0x7f8] sm:$0xff]
    %v366 = vld [vmem:[#allocation5 + $0x800] sm:$0xff]
    %v367 = vld [vmem:[#allocation5 + $0x808] sm:$0xff]
    %v368 = vld [vmem:[#allocation5 + $0x810] sm:$0xff]
    %v369 = vld [vmem:[#allocation5 + $0x818] sm:$0xff]
    %v370 = vld [vmem:[#allocation5 + $0x820] sm:$0xff]
    %v371 = vld [vmem:[#allocation5 + $0x828] sm:$0xff]
    %v372 = vld [vmem:[#allocation5 + $0x830] sm:$0xff]
    %v373 = vld [vmem:[#allocation5 + $0x838] sm:$0xff]
    %v374 = vld [vmem:[#allocation5 + $0x840] sm:$0xff]
    %v375 = vld [vmem:[#allocation5 + $0x848] sm:$0xff]
    %v376 = vld [vmem:[#allocation5 + $0x850] sm:$0xff]
    %v377 = vld [vmem:[#allocation5 + $0x858] sm:$0xff]
    %v378 = vld [vmem:[#allocation5 + $0x860] sm:$0xff]
    %v379 = vld [vmem:[#allocation5 + $0x868] sm:$0xff]
    %v380 = vld [vmem:[#allocation5 + $0x870] sm:$0xff]
    %v381 = vld [vmem:[#allocation5 + $0x878] sm:$0xff]
    %v382 = vld [vmem:[#allocation5 + $0x880] sm:$0xff]
    %v383 = vld [vmem:[#allocation5 + $0x888] sm:$0xff]
    %v384 = vld [vmem:[#allocation5 + $0x890] sm:$0xff]
    %v385 = vld [vmem:[#allocation5 + $0x898] sm:$0xff]
    %v386 = vld [vmem:[#allocation5 + $0x8a0] sm:$0xff]
    %v387 = vld [vmem:[#allocation5 + $0x8a8] sm:$0xff]
    %v388 = vld [vmem:[#allocation5 + $0x8b0] sm:$0xff]
    %v389 = vld [vmem:[#allocation5 + $0x8b8] sm:$0xff]
    %v390 = vld [vmem:[#allocation5 + $0x8c0] sm:$0xff]
    %v391 = vld [vmem:[#allocation5 + $0x8c8] sm:$0xff]
    %v392 = vld [vmem:[#allocation5 + $0x8d0] sm:$0xff]
    %v393 = vld [vmem:[#allocation5 + $0x8d8] sm:$0xff]
    %v394 = vld [vmem:[#allocation5 + $0x8e0] sm:$0xff]
    %v395 = vld [vmem:[#allocation5 + $0x8e8] sm:$0xff]
    %v396 = vld [vmem:[#allocation5 + $0x8f0] sm:$0xff]
    %v397 = vld [vmem:[#allocation5 + $0x8f8] sm:$0xff]
    %v398 = vld [vmem:[#allocation5 + $0x900] sm:$0xff]
    %v399 = vld [vmem:[#allocation5 + $0x908] sm:$0xff]
    %v400 = vld [vmem:[#allocation5 + $0x910] sm:$0xff]
    %v401 = vld [vmem:[#allocation5 + $0x918] sm:$0xff]
    %v402 = vld [vmem:[#allocation5 + $0x920] sm:$0xff]
    %v403 = vld [vmem:[#allocation5 + $0x928] sm:$0xff]
    %v404 = vld [vmem:[#allocation5 + $0x930] sm:$0xff]
    %v405 = vld [vmem:[#allocation5 + $0x938] sm:$0xff]
    %v406 = vld [vmem:[#allocation5 + $0x940] sm:$0xff]
    %v407 = vld [vmem:[#allocation5 + $0x948] sm:$0xff]
    %v408 = vld [vmem:[#allocation5 + $0x950] sm:$0xff]
    %v409 = vld [vmem:[#allocation5 + $0x958] sm:$0xff]
    %v410 = vld [vmem:[#allocation5 + $0x960] sm:$0xff]
    %v411 = vld [vmem:[#allocation5 + $0x968] sm:$0xff]
    %v412 = vld [vmem:[#allocation5 + $0x970] sm:$0xff]
    %v413 = vld [vmem:[#allocation5 + $0x978] sm:$0xff]
    %v414 = vld [vmem:[#allocation5 + $0x980] sm:$0xff]
    %v415 = vld [vmem:[#allocation5 + $0x988] sm:$0xff]
    %v416 = vld [vmem:[#allocation5 + $0x990] sm:$0xff]
    %v417 = vld [vmem:[#allocation5 + $0x998] sm:$0xff]
    %v418 = vld [vmem:[#allocation5 + $0x9a0] sm:$0xff]
    %v419 = vld [vmem:[#allocation5 + $0x9a8] sm:$0xff]
    %v420 = vld [vmem:[#allocation5 + $0x9b0] sm:$0xff]
    %v421 = vld [vmem:[#allocation5 + $0x9b8] sm:$0xff]
    %v422 = vld [vmem:[#allocation5 + $0x9c0] sm:$0xff]
    %v423 = vld [vmem:[#allocation5 + $0x9c8] sm:$0xff]
    %v424 = vld [vmem:[#allocation5 + $0x9d0] sm:$0xff]
    %v425 = vld [vmem:[#allocation5 + $0x9d8] sm:$0xff]
    %v426 = vld [vmem:[#allocation5 + $0x9e0] sm:$0xff]
    %v427 = vld [vmem:[#allocation5 + $0x9e8] sm:$0xff]
    %v428 = vld [vmem:[#allocation5 + $0x9f0] sm:$0xff]
    %v429 = vld [vmem:[#allocation5 + $0x9f8] sm:$0xff]
    %v430 = vld [vmem:[#allocation5 + $0xa00] sm:$0xff]
    %v431 = vld [vmem:[#allocation5 + $0xa08] sm:$0xff]
    %v432 = vld [vmem:[#allocation5 + $0xa10] sm:$0xff]
    %v433 = vld [vmem:[#allocation5 + $0xa18] sm:$0xff]
    %v434 = vld [vmem:[#allocation5 + $0xa20] sm:$0xff]
    %v435 = vld [vmem:[#allocation5 + $0xa28] sm:$0xff]
    %v436 = vld [vmem:[#allocation5 + $0xa30] sm:$0xff]
    %v437 = vld [vmem:[#allocation5 + $0xa38] sm:$0xff]
    %v438 = vld [vmem:[#allocation5 + $0xa40] sm:$0xff]
    %v439 = vld [vmem:[#allocation5 + $0xa48] sm:$0xff]
    %v440 = vld [vmem:[#allocation5 + $0xa50] sm:$0xff]
    %v441 = vld [vmem:[#allocation5 + $0xa58] sm:$0xff]
    %v442 = vld [vmem:[#allocation5 + $0xa60] sm:$0xff]
    %v443 = vld [vmem:[#allocation5 + $0xa68] sm:$0xff]
    %v444 = vld [vmem:[#allocation5 + $0xa70] sm:$0xff]
    %v445 = vld [vmem:[#allocation5 + $0xa78] sm:$0xff]
    %v446 = vld [vmem:[#allocation5 + $0xa80] sm:$0xff]
    %v447 = vld [vmem:[#allocation5 + $0xa88] sm:$0xff]
    %v448 = vld [vmem:[#allocation5 + $0xa90] sm:$0xff]
    %v449 = vld [vmem:[#allocation5 + $0xa98] sm:$0xff]
    %v450 = vld [vmem:[#allocation5 + $0xaa0] sm:$0xff]
    %v451 = vld [vmem:[#allocation5 + $0xaa8] sm:$0xff]
    %v452 = vld [vmem:[#allocation5 + $0xab0] sm:$0xff]
    %v453 = vld [vmem:[#allocation5 + $0xab8] sm:$0xff]
    %v454 = vld [vmem:[#allocation5 + $0xac0] sm:$0xff]
    %v455 = vld [vmem:[#allocation5 + $0xac8] sm:$0xff]
    %v456 = vld [vmem:[#allocation5 + $0xad0] sm:$0xff]
    %v457 = vld [vmem:[#allocation5 + $0xad8] sm:$0xff]
    %v458 = vld [vmem:[#allocation5 + $0xae0] sm:$0xff]
    %v459 = vld [vmem:[#allocation5 + $0xae8] sm:$0xff]
    %v460 = vld [vmem:[#allocation5 + $0xaf0] sm:$0xff]
    %v461 = vld [vmem:[#allocation5 + $0xaf8] sm:$0xff]
    %v462 = vld [vmem:[#allocation5 + $0xb00] sm:$0xff]
    %v463 = vld [vmem:[#allocation5 + $0xb08] sm:$0xff]
    %v464 = vld [vmem:[#allocation5 + $0xb10] sm:$0xff]
    %v465 = vld [vmem:[#allocation5 + $0xb18] sm:$0xff]
    %v466 = vld [vmem:[#allocation5 + $0xb20] sm:$0xff]
    %v467 = vld [vmem:[#allocation5 + $0xb28] sm:$0xff]
    %v468 = vld [vmem:[#allocation5 + $0xb30] sm:$0xff]
    %v469 = vld [vmem:[#allocation5 + $0xb38] sm:$0xff]
    %v470 = vld [vmem:[#allocation5 + $0xb40] sm:$0xff]
    %v471 = vld [vmem:[#allocation5 + $0xb48] sm:$0xff]
    %v472 = vld [vmem:[#allocation5 + $0xb50] sm:$0xff]
    %v473 = vld [vmem:[#allocation5 + $0xb58] sm:$0xff]
    %v474 = vld [vmem:[#allocation5 + $0xb60] sm:$0xff]
    %v475 = vld [vmem:[#allocation5 + $0xb68] sm:$0xff]
    %v476 = vld [vmem:[#allocation5 + $0xb70] sm:$0xff]
    %v477 = vld [vmem:[#allocation5 + $0xb78] sm:$0xff]
    %v478 = vld [vmem:[#allocation5 + $0xb80] sm:$0xff]
    %v479 = vld [vmem:[#allocation5 + $0xb88] sm:$0xff]
    %v480 = vld [vmem:[#allocation5 + $0xb90] sm:$0xff]
    %v481 = vld [vmem:[#allocation5 + $0xb98] sm:$0xff]
    %v482 = vld [vmem:[#allocation5 + $0xba0] sm:$0xff]
    %v483 = vld [vmem:[#allocation5 + $0xba8] sm:$0xff]
    %v484 = vld [vmem:[#allocation5 + $0xbb0] sm:$0xff]
    %v485 = vld [vmem:[#allocation5 + $0xbb8] sm:$0xff]
    %v486 = vld [vmem:[#allocation5 + $0xbc0] sm:$0xff]
    %v487 = vld [vmem:[#allocation5 + $0xbc8] sm:$0xff]
    %v488 = vld [vmem:[#allocation5 + $0xbd0] sm:$0xff]
    %v489 = vld [vmem:[#allocation5 + $0xbd8] sm:$0xff]
    %v490 = vld [vmem:[#allocation5 + $0xbe0] sm:$0xff]
    %v491 = vld [vmem:[#allocation5 + $0xbe8] sm:$0xff]
    %v492 = vld [vmem:[#allocation5 + $0xbf0] sm:$0xff]
    %v493 = vld [vmem:[#allocation5 + $0xbf8] sm:$0xff]
    %v494 = vld [vmem:[#allocation5 + $0xc00] sm:$0xff]
    %v495 = vld [vmem:[#allocation5 + $0xc08] sm:$0xff]
    %v496 = vld [vmem:[#allocation5 + $0xc10] sm:$0xff]
    %v497 = vld [vmem:[#allocation5 + $0xc18] sm:$0xff]
    %v498 = vld [vmem:[#allocation5 + $0xc20] sm:$0xff]
    %v499 = vld [vmem:[#allocation5 + $0xc28] sm:$0xff]
    %v500 = vld [vmem:[#allocation5 + $0xc30] sm:$0xff]
    %v501 = vld [vmem:[#allocation5 + $0xc38] sm:$0xff]
    %v502 = vld [vmem:[#allocation5 + $0xc40] sm:$0xff]
    %v503 = vld [vmem:[#allocation5 + $0xc48] sm:$0xff]
    %v504 = vld [vmem:[#allocation5 + $0xc50] sm:$0xff]
    %v505 = vld [vmem:[#allocation5 + $0xc58] sm:$0xff]
    %v506 = vld [vmem:[#allocation5 + $0xc60] sm:$0xff]
    %v507 = vld [vmem:[#allocation5 + $0xc68] sm:$0xff]
    %v508 = vld [vmem:[#allocation5 + $0xc70] sm:$0xff]
    %v509 = vld [vmem:[#allocation5 + $0xc78] sm:$0xff]
    %v510 = vld [vmem:[#allocation5 + $0xc80] sm:$0xff]
    %v511 = vld [vmem:[#allocation5 + $0xc88] sm:$0xff]
    %v512 = vld [vmem:[#allocation5 + $0xc90] sm:$0xff]
    %v513 = vld [vmem:[#allocation5 + $0xc98] sm:$0xff]
    %v514 = vld [vmem:[#allocation5 + $0xca0] sm:$0xff]
    %v515 = vld [vmem:[#allocation5 + $0xca8] sm:$0xff]
    %v516 = vld [vmem:[#allocation5 + $0xcb0] sm:$0xff]
    %v517 = vld [vmem:[#allocation5 + $0xcb8] sm:$0xff]
    %v518 = vld [vmem:[#allocation5 + $0xcc0] sm:$0xff]
    %v519 = vld [vmem:[#allocation5 + $0xcc8] sm:$0xff]
    %v520 = vld [vmem:[#allocation5 + $0xcd0] sm:$0xff]
    %v521 = vld [vmem:[#allocation5 + $0xcd8] sm:$0xff]
    %v522 = vld [vmem:[#allocation5 + $0xce0] sm:$0xff]
    %v523 = vld [vmem:[#allocation5 + $0xce8] sm:$0xff]
    %v524 = vld [vmem:[#allocation5 + $0xcf0] sm:$0xff]
    %v525 = vld [vmem:[#allocation5 + $0xcf8] sm:$0xff]
    %v526 = vld [vmem:[#allocation5 + $0xd00] sm:$0xff]
    %v527 = vld [vmem:[#allocation5 + $0xd08] sm:$0xff]
    %v528 = vld [vmem:[#allocation5 + $0xd10] sm:$0xff]
    %v529 = vld [vmem:[#allocation5 + $0xd18] sm:$0xff]
    %v530 = vld [vmem:[#allocation5 + $0xd20] sm:$0xff]
    %v531 = vld [vmem:[#allocation5 + $0xd28] sm:$0xff]
    %v532 = vld [vmem:[#allocation5 + $0xd30] sm:$0xff]
    %v533 = vld [vmem:[#allocation5 + $0xd38] sm:$0xff]
    %v534 = vld [vmem:[#allocation5 + $0xd40] sm:$0xff]
    %v535 = vld [vmem:[#allocation5 + $0xd48] sm:$0xff]
    %v536 = vld [vmem:[#allocation5 + $0xd50] sm:$0xff]
    %v537 = vld [vmem:[#allocation5 + $0xd58] sm:$0xff]
    %v538 = vld [vmem:[#allocation5 + $0xd60] sm:$0xff]
    %v539 = vld [vmem:[#allocation5 + $0xd68] sm:$0xff]
    %v540 = vld [vmem:[#allocation5 + $0xd70] sm:$0xff]
    %v541 = vld [vmem:[#allocation5 + $0xd78] sm:$0xff]
    %v542 = vld [vmem:[#allocation5 + $0xd80] sm:$0xff]
    %v543 = vld [vmem:[#allocation5 + $0xd88] sm:$0xff]
    %v544 = vld [vmem:[#allocation5 + $0xd90] sm:$0xff]
    %v545 = vld [vmem:[#allocation5 + $0xd98] sm:$0xff]
    %v546 = vld [vmem:[#allocation5 + $0xda0] sm:$0xff]
    %v547 = vld [vmem:[#allocation5 + $0xda8] sm:$0xff]
    %v548 = vld [vmem:[#allocation5 + $0xdb0] sm:$0xff]
    %v549 = vld [vmem:[#allocation5 + $0xdb8] sm:$0xff]
    %v550 = vld [vmem:[#allocation5 + $0xdc0] sm:$0xff]
    %v551 = vld [vmem:[#allocation5 + $0xdc8] sm:$0xff]
    %v552 = vld [vmem:[#allocation5 + $0xdd0] sm:$0xff]
    %v553 = vld [vmem:[#allocation5 + $0xdd8] sm:$0xff]
    %v554 = vld [vmem:[#allocation5 + $0xde0] sm:$0xff]
    %v555 = vld [vmem:[#allocation5 + $0xde8] sm:$0xff]
    %v556 = vld [vmem:[#allocation5 + $0xdf0] sm:$0xff]
    %v557 = vld [vmem:[#allocation5 + $0xdf8] sm:$0xff]
    %v558 = vld [vmem:[#allocation5 + $0xe00] sm:$0xff]
    %v559 = vld [vmem:[#allocation5 + $0xe08] sm:$0xff]
    %v560 = vld [vmem:[#allocation5 + $0xe10] sm:$0xff]
    %v561 = vld [vmem:[#allocation5 + $0xe18] sm:$0xff]
    %v562 = vld [vmem:[#allocation5 + $0xe20] sm:$0xff]
    %v563 = vld [vmem:[#allocation5 + $0xe28] sm:$0xff]
    %v564 = vld [vmem:[#allocation5 + $0xe30] sm:$0xff]
    %v565 = vld [vmem:[#allocation5 + $0xe38] sm:$0xff]
    %v566 = vld [vmem:[#allocation5 + $0xe40] sm:$0xff]
    %v567 = vld [vmem:[#allocation5 + $0xe48] sm:$0xff]
    %v568 = vld [vmem:[#allocation5 + $0xe50] sm:$0xff]
    %v569 = vld [vmem:[#allocation5 + $0xe58] sm:$0xff]
    %v570 = vld [vmem:[#allocation5 + $0xe60] sm:$0xff]
    %v571 = vld [vmem:[#allocation5 + $0xe68] sm:$0xff]
    %v572 = vld [vmem:[#allocation5 + $0xe70] sm:$0xff]
    %v573 = vld [vmem:[#allocation5 + $0xe78] sm:$0xff]
    %v574 = vld [vmem:[#allocation5 + $0xe80] sm:$0xff]
    %v575 = vld [vmem:[#allocation5 + $0xe88] sm:$0xff]
    %v576 = vld [vmem:[#allocation5 + $0xe90] sm:$0xff]
    %v577 = vld [vmem:[#allocation5 + $0xe98] sm:$0xff]
    %v578 = vld [vmem:[#allocation5 + $0xea0] sm:$0xff]
    %v579 = vld [vmem:[#allocation5 + $0xea8] sm:$0xff]
    %v580 = vld [vmem:[#allocation5 + $0xeb0] sm:$0xff]
    %v581 = vld [vmem:[#allocation5 + $0xeb8] sm:$0xff]
    %v582 = vld [vmem:[#allocation5 + $0xec0] sm:$0xff]
    %v583 = vld [vmem:[#allocation5 + $0xec8] sm:$0xff]
    %v584 = vld [vmem:[#allocation5 + $0xed0] sm:$0xff]
    %v585 = vld [vmem:[#allocation5 + $0xed8] sm:$0xff]
    %v586 = vld [vmem:[#allocation5 + $0xee0] sm:$0xff]
    %v587 = vld [vmem:[#allocation5 + $0xee8] sm:$0xff]
    %v588 = vld [vmem:[#allocation5 + $0xef0] sm:$0xff]
    %v589 = vld [vmem:[#allocation5 + $0xef8] sm:$0xff]
    %v590 = vld [vmem:[#allocation5 + $0xf00] sm:$0xff]
    %v591 = vld [vmem:[#allocation5 + $0xf08] sm:$0xff]
    %v592 = vld [vmem:[#allocation5 + $0xf10] sm:$0xff]
    %v593 = vld [vmem:[#allocation5 + $0xf18] sm:$0xff]
    %v594 = vld [vmem:[#allocation5 + $0xf20] sm:$0xff]
    %v595 = vld [vmem:[#allocation5 + $0xf28] sm:$0xff]
    %v596 = vld [vmem:[#allocation5 + $0xf30] sm:$0xff]
    %v597 = vld [vmem:[#allocation5 + $0xf38] sm:$0xff]
    %v598 = vld [vmem:[#allocation5 + $0xf40] sm:$0xff]
    %v599 = vld [vmem:[#allocation5 + $0xf48] sm:$0xff]
    %v600 = vld [vmem:[#allocation5 + $0xf50] sm:$0xff]
    %v601 = vld [vmem:[#allocation5 + $0xf58] sm:$0xff]
    %v602 = vld [vmem:[#allocation5 + $0xf60] sm:$0xff]
    %v603 = vld [vmem:[#allocation5 + $0xf68] sm:$0xff]
    %v604 = vld [vmem:[#allocation5 + $0xf70] sm:$0xff]
    %v605 = vld [vmem:[#allocation5 + $0xf78] sm:$0xff]
    %v606 = vld [vmem:[#allocation5 + $0xf80] sm:$0xff]
    %v607 = vld [vmem:[#allocation5 + $0xf88] sm:$0xff]
    %v608 = vld [vmem:[#allocation5 + $0xf90] sm:$0xff]
    %v609 = vld [vmem:[#allocation5 + $0xf98] sm:$0xff]
    %v610 = vld [vmem:[#allocation5 + $0xfa0] sm:$0xff]
    %v611 = vld [vmem:[#allocation5 + $0xfa8] sm:$0xff]
    %v612 = vld [vmem:[#allocation5 + $0xfb0] sm:$0xff]
    %v613 = vld [vmem:[#allocation5 + $0xfb8] sm:$0xff]
    %v614 = vld [vmem:[#allocation5 + $0xfc0] sm:$0xff]
    %v615 = vld [vmem:[#allocation5 + $0xfc8] sm:$0xff]
    %v616 = vld [vmem:[#allocation5 + $0xfd0] sm:$0xff]
    %v617 = vld [vmem:[#allocation5 + $0xfd8] sm:$0xff]
    %v618 = vld [vmem:[#allocation5 + $0xfe0] sm:$0xff]
    %v619 = vld [vmem:[#allocation5 + $0xfe8] sm:$0xff]
    %v620 = vld [vmem:[#allocation5 + $0xff0] sm:$0xff]
    %v621 = vld [vmem:[#allocation5 + $0xff8] sm:$0xff]
    %v624 = vcombine.high %v108, %v108
    %v626 = vunpack.c.l.s4 1983009808
    %v627 = vunpack.c.0.s8 %v626
    %v628 = vlaneseq
    %v629 = vshrl.u32 %v628, 7
    %v630 = vsub.s32 %v627, %v629
    %v631 = vrot.slane %v108, %v630
    %v633 = vunpack.c.l.s4 1983009808
    %v634 = vunpack.c.0.s8 %v633
    %v635 = vlaneseq
    %v636 = vshrl.u32 %v635, 7
    %v637 = vsub.s32 %v634, %v636
    %v638 = vrot.slane %v624, %v637
    %v639 = vcombine.high %v631, %v631
    %v640 = vcombine.high %v638, %v638
    %v641 = vcombine.high %v109, %v109
    %v643 = vunpack.c.l.s4 1983009808
    %v644 = vunpack.c.0.s8 %v643
    %v645 = vlaneseq
    %v646 = vshrl.u32 %v645, 7
    %v647 = vsub.s32 %v644, %v646
    %v648 = vrot.slane %v109, %v647
    %v650 = vunpack.c.l.s4 1983009808
    %v651 = vunpack.c.0.s8 %v650
    %v652 = vlaneseq
    %v653 = vshrl.u32 %v652, 7
    %v654 = vsub.s32 %v651, %v653
    %v655 = vrot.slane %v641, %v654
    %v656 = vcombine.high %v648, %v648
    %v657 = vcombine.high %v655, %v655
    %666 = vmatprep.subr.mxu0 %v111
    %667 = vmatpush1.msra.mxu0 %v110
    %668 = vmatprep.subr.mxu0 %v115
    %669 = vmatpush1.msra.mxu0 %v114
    %670 = vmatprep.subr.mxu0 %v119
    %671 = vmatpush1.msra.mxu0 %v118
    %672 = vmatprep.subr.mxu0 %v123
    %673 = vmatpush1.msra.mxu0 %v122
    %674 = vmatprep.subr.mxu0 %v127
    %675 = vmatpush1.msra.mxu0 %v126
    %676 = vmatprep.subr.mxu0 %v131
    %677 = vmatpush1.msra.mxu0 %v130
    %678 = vmatprep.subr.mxu0 %v135
    %679 = vmatpush1.msra.mxu0 %v134
    %680 = vmatprep.subr.mxu0 %v139
    %681 = vmatpush1.msra.mxu0 %v138
    %682 = vmatprep.subr.mxu0 %v143
    %683 = vmatpush1.msra.mxu0 %v142
    %684 = vmatprep.subr.mxu0 %v147
    %685 = vmatpush1.msra.mxu0 %v146
    %686 = vmatprep.subr.mxu0 %v151
    %687 = vmatpush1.msra.mxu0 %v150
    %688 = vmatprep.subr.mxu0 %v155
    %689 = vmatpush1.msra.mxu0 %v154
    %690 = vmatprep.subr.mxu0 %v159
    %691 = vmatpush1.msra.mxu0 %v158
    %692 = vmatprep.subr.mxu0 %v163
    %693 = vmatpush1.msra.mxu0 %v162
    %694 = vmatprep.subr.mxu0 %v167
    %695 = vmatpush1.msra.mxu0 %v166
    %696 = vmatprep.subr.mxu0 %v171
    %697 = vmatpush1.msra.mxu0 %v170
    %698 = vmatprep.subr.mxu0 %v175
    %699 = vmatpush1.msra.mxu0 %v174
    %700 = vmatprep.subr.mxu0 %v179
    %701 = vmatpush1.msra.mxu0 %v178
    %702 = vmatprep.subr.mxu0 %v183
    %703 = vmatpush1.msra.mxu0 %v182
    %704 = vmatprep.subr.mxu0 %v187
    %705 = vmatpush1.msra.mxu0 %v186
    %706 = vmatprep.subr.mxu0 %v191
    %707 = vmatpush1.msra.mxu0 %v190
    %708 = vmatprep.subr.mxu0 %v195
    %709 = vmatpush1.msra.mxu0 %v194
    %710 = vmatprep.subr.mxu0 %v199
    %711 = vmatpush1.msra.mxu0 %v198
    %712 = vmatprep.subr.mxu0 %v203
    %713 = vmatpush1.msra.mxu0 %v202
    %714 = vmatprep.subr.mxu0 %v207
    %715 = vmatpush1.msra.mxu0 %v206
    %716 = vmatprep.subr.mxu0 %v211
    %717 = vmatpush1.msra.mxu0 %v210
    %718 = vmatprep.subr.mxu0 %v215
    %719 = vmatpush1.msra.mxu0 %v214
    %720 = vmatprep.subr.mxu0 %v219
    %721 = vmatpush1.msra.mxu0 %v218
    %722 = vmatprep.subr.mxu0 %v223
    %723 = vmatpush1.msra.mxu0 %v222
    %724 = vmatprep.subr.mxu0 %v227
    %725 = vmatpush1.msra.mxu0 %v226
    %726 = vmatprep.subr.mxu0 %v231
    %727 = vmatpush1.msra.mxu0 %v230
    %728 = vmatprep.subr.mxu0 %v235
    %729 = vmatpush1.msra.mxu0 %v234
    %730 = vmatprep.mubr.f32.mxu0 %v639
    %731 = vmatmul.mubr.f32.gmra.mrb[0].mxu0 %v631
    %v732 = vpop.f32.mrb[0].mxu0
    %v733 = vadd.f32 0.0, %v732
    %v734 = vpop.f32.mrb[0].mxu0
    %v735 = vadd.f32 0.0, %v734
    %736 = vdwg.mxu0
    %737 = vmatprep.subr.mxu0 %v239
    %738 = vmatpush1.msra.mxu0 %v238
    %739 = vmatprep.subr.mxu0 %v243
    %740 = vmatpush1.msra.mxu0 %v242
    %741 = vmatprep.subr.mxu0 %v247
    %742 = vmatpush1.msra.mxu0 %v246
    %743 = vmatprep.subr.mxu0 %v251
    %744 = vmatpush1.msra.mxu0 %v250
    %745 = vmatprep.subr.mxu0 %v255
    %746 = vmatpush1.msra.mxu0 %v254
    %747 = vmatprep.subr.mxu0 %v259
    %748 = vmatpush1.msra.mxu0 %v258
    %749 = vmatprep.subr.mxu0 %v263
    %750 = vmatpush1.msra.mxu0 %v262
    %751 = vmatprep.subr.mxu0 %v267
    %752 = vmatpush1.msra.mxu0 %v266
    %753 = vmatprep.subr.mxu0 %v271
    %754 = vmatpush1.msra.mxu0 %v270
    %755 = vmatprep.subr.mxu0 %v275
    %756 = vmatpush1.msra.mxu0 %v274
    %757 = vmatprep.subr.mxu0 %v279
    %758 = vmatpush1.msra.mxu0 %v278
    %759 = vmatprep.subr.mxu0 %v283
    %760 = vmatpush1.msra.mxu0 %v282
    %761 = vmatprep.subr.mxu0 %v287
    %762 = vmatpush1.msra.mxu0 %v286
    %763 = vmatprep.subr.mxu0 %v291
    %764 = vmatpush1.msra.mxu0 %v290
    %765 = vmatprep.subr.mxu0 %v295
    %766 = vmatpush1.msra.mxu0 %v294
    %767 = vmatprep.subr.mxu0 %v299
    %768 = vmatpush1.msra.mxu0 %v298
    %769 = vmatprep.subr.mxu0 %v303
    %770 = vmatpush1.msra.mxu0 %v302
    %771 = vmatprep.subr.mxu0 %v307
    %772 = vmatpush1.msra.mxu0 %v306
    %773 = vmatprep.subr.mxu0 %v311
    %774 = vmatpush1.msra.mxu0 %v310
    %775 = vmatprep.subr.mxu0 %v315
    %776 = vmatpush1.msra.mxu0 %v314
    %777 = vmatprep.subr.mxu0 %v319
    %778 = vmatpush1.msra.mxu0 %v318
    %779 = vmatprep.subr.mxu0 %v323
    %780 = vmatpush1.msra.mxu0 %v322
    %781 = vmatprep.subr.mxu0 %v327
    %782 = vmatpush1.msra.mxu0 %v326
    %783 = vmatprep.subr.mxu0 %v331
    %784 = vmatpush1.msra.mxu0 %v330
    %785 = vmatprep.subr.mxu0 %v335
    %786 = vmatpush1.msra.mxu0 %v334
    %787 = vmatprep.subr.mxu0 %v339
    %788 = vmatpush1.msra.mxu0 %v338
    %789 = vmatprep.subr.mxu0 %v343
    %790 = vmatpush1.msra.mxu0 %v342
    %791 = vmatprep.subr.mxu0 %v347
    %792 = vmatpush1.msra.mxu0 %v346
    %793 = vmatprep.subr.mxu0 %v351
    %794 = vmatpush1.msra.mxu0 %v350
    %795 = vmatprep.subr.mxu0 %v355
    %796 = vmatpush1.msra.mxu0 %v354
    %797 = vmatprep.subr.mxu0 %v359
    %798 = vmatpush1.msra.mxu0 %v358
    %799 = vmatprep.subr.mxu0 %v363
    %800 = vmatpush1.msra.mxu0 %v362
    %801 = vmatprep.mubr.f32.mxu0 %v640
    %802 = vmatmul.mubr.f32.gmra.mrb[0].mxu0 %v638
    %v803 = vpop.f32.mrb[0].mxu0
    %v804 = vadd.f32 %v733, %v803
    %v805 = vpop.f32.mrb[0].mxu0
    %v806 = vadd.f32 %v735, %v805
    %807 = vdwg.mxu0
    %808 = vmatprep.subr.mxu0 %v367
    %809 = vmatpush1.msra.mxu0 %v366
    %810 = vmatprep.subr.mxu0 %v371
    %811 = vmatpush1.msra.mxu0 %v370
    %812 = vmatprep.subr.mxu0 %v375
    %813 = vmatpush1.msra.mxu0 %v374
    %814 = vmatprep.subr.mxu0 %v379
    %815 = vmatpush1.msra.mxu0 %v378
    %816 = vmatprep.subr.mxu0 %v383
    %817 = vmatpush1.msra.mxu0 %v382
    %818 = vmatprep.subr.mxu0 %v387
    %819 = vmatpush1.msra.mxu0 %v386
    %820 = vmatprep.subr.mxu0 %v391
    %821 = vmatpush1.msra.mxu0 %v390
    %822 = vmatprep.subr.mxu0 %v395
    %823 = vmatpush1.msra.mxu0 %v394
    %824 = vmatprep.subr.mxu0 %v399
    %825 = vmatpush1.msra.mxu0 %v398
    %826 = vmatprep.subr.mxu0 %v403
    %827 = vmatpush1.msra.mxu0 %v402
    %828 = vmatprep.subr.mxu0 %v407
    %829 = vmatpush1.msra.mxu0 %v406
    %830 = vmatprep.subr.mxu0 %v411
    %831 = vmatpush1.msra.mxu0 %v410
    %832 = vmatprep.subr.mxu0 %v415
    %833 = vmatpush1.msra.mxu0 %v414
    %834 = vmatprep.subr.mxu0 %v419
    %835 = vmatpush1.msra.mxu0 %v418
    %836 = vmatprep.subr.mxu0 %v423
    %837 = vmatpush1.msra.mxu0 %v422
    %838 = vmatprep.subr.mxu0 %v427
    %839 = vmatpush1.msra.mxu0 %v426
    %840 = vmatprep.subr.mxu0 %v431
    %841 = vmatpush1.msra.mxu0 %v430
    %842 = vmatprep.subr.mxu0 %v435
    %843 = vmatpush1.msra.mxu0 %v434
    %844 = vmatprep.subr.mxu0 %v439
    %845 = vmatpush1.msra.mxu0 %v438
    %846 = vmatprep.subr.mxu0 %v443
    %847 = vmatpush1.msra.mxu0 %v442
    %848 = vmatprep.subr.mxu0 %v447
    %849 = vmatpush1.msra.mxu0 %v446
    %850 = vmatprep.subr.mxu0 %v451
    %851 = vmatpush1.msra.mxu0 %v450
    %852 = vmatprep.subr.mxu0 %v455
    %853 = vmatpush1.msra.mxu0 %v454
    %854 = vmatprep.subr.mxu0 %v459
    %855 = vmatpush1.msra.mxu0 %v458
    %856 = vmatprep.subr.mxu0 %v463
    %857 = vmatpush1.msra.mxu0 %v462
    %858 = vmatprep.subr.mxu0 %v467
    %859 = vmatpush1.msra.mxu0 %v466
    %860 = vmatprep.subr.mxu0 %v471
    %861 = vmatpush1.msra.mxu0 %v470
    %862 = vmatprep.subr.mxu0 %v475
    %863 = vmatpush1.msra.mxu0 %v474
    %864 = vmatprep.subr.mxu0 %v479
    %865 = vmatpush1.msra.mxu0 %v478
    %866 = vmatprep.subr.mxu0 %v483
    %867 = vmatpush1.msra.mxu0 %v482
    %868 = vmatprep.subr.mxu0 %v487
    %869 = vmatpush1.msra.mxu0 %v486
    %870 = vmatprep.subr.mxu0 %v491
    %871 = vmatpush1.msra.mxu0 %v490
    %872 = vmatprep.mubr.f32.mxu0 %v656
    %873 = vmatmul.mubr.f32.gmra.mrb[0].mxu0 %v648
    %v874 = vpop.f32.mrb[0].mxu0
    %v875 = vadd.f32 %v804, %v874
    %v876 = vpop.f32.mrb[0].mxu0
    %v877 = vadd.f32 %v806, %v876
    %878 = vdwg.mxu0
    %879 = vmatprep.subr.mxu0 %v495
    %880 = vmatpush1.msra.mxu0 %v494
    %881 = vmatprep.subr.mxu0 %v499
    %882 = vmatpush1.msra.mxu0 %v498
    %883 = vmatprep.subr.mxu0 %v503
    %884 = vmatpush1.msra.mxu0 %v502
    %885 = vmatprep.subr.mxu0 %v507
    %886 = vmatpush1.msra.mxu0 %v506
    %887 = vmatprep.subr.mxu0 %v511
    %888 = vmatpush1.msra.mxu0 %v510
    %889 = vmatprep.subr.mxu0 %v515
    %890 = vmatpush1.msra.mxu0 %v514
    %891 = vmatprep.subr.mxu0 %v519
    %892 = vmatpush1.msra.mxu0 %v518
    %893 = vmatprep.subr.mxu0 %v523
    %894 = vmatpush1.msra.mxu0 %v522
    %895 = vmatprep.subr.mxu0 %v527
    %896 = vmatpush1.msra.mxu0 %v526
    %897 = vmatprep.subr.mxu0 %v531
    %898 = vmatpush1.msra.mxu0 %v530
    %899 = vmatprep.subr.mxu0 %v535
    %900 = vmatpush1.msra.mxu0 %v534
    %901 = vmatprep.subr.mxu0 %v539
    %902 = vmatpush1.msra.mxu0 %v538
    %903 = vmatprep.subr.mxu0 %v543
    %904 = vmatpush1.msra.mxu0 %v542
    %905 = vmatprep.subr.mxu0 %v547
    %906 = vmatpush1.msra.mxu0 %v546
    %907 = vmatprep.subr.mxu0 %v551
    %908 = vmatpush1.msra.mxu0 %v550
    %909 = vmatprep.subr.mxu0 %v555
    %910 = vmatpush1.msra.mxu0 %v554
    %911 = vmatprep.subr.mxu0 %v559
    %912 = vmatpush1.msra.mxu0 %v558
    %913 = vmatprep.subr.mxu0 %v563
    %914 = vmatpush1.msra.mxu0 %v562
    %915 = vmatprep.subr.mxu0 %v567
    %916 = vmatpush1.msra.mxu0 %v566
    %917 = vmatprep.subr.mxu0 %v571
    %918 = vmatpush1.msra.mxu0 %v570
    %919 = vmatprep.subr.mxu0 %v575
    %920 = vmatpush1.msra.mxu0 %v574
    %921 = vmatprep.subr.mxu0 %v579
    %922 = vmatpush1.msra.mxu0 %v578
    %923 = vmatprep.subr.mxu0 %v583
    %924 = vmatpush1.msra.mxu0 %v582
    %925 = vmatprep.subr.mxu0 %v587
    %926 = vmatpush1.msra.mxu0 %v586
    %927 = vmatprep.subr.mxu0 %v591
    %928 = vmatpush1.msra.mxu0 %v590
    %929 = vmatprep.subr.mxu0 %v595
    %930 = vmatpush1.msra.mxu0 %v594
    %931 = vmatprep.subr.mxu0 %v599
    %932 = vmatpush1.msra.mxu0 %v598
    %933 = vmatprep.subr.mxu0 %v603
    %934 = vmatpush1.msra.mxu0 %v602
    %935 = vmatprep.subr.mxu0 %v607
    %936 = vmatpush1.msra.mxu0 %v606
    %937 = vmatprep.subr.mxu0 %v611
    %938 = vmatpush1.msra.mxu0 %v610
    %939 = vmatprep.subr.mxu0 %v615
    %940 = vmatpush1.msra.mxu0 %v614
    %941 = vmatprep.subr.mxu0 %v619
    %942 = vmatpush1.msra.mxu0 %v618
    %943 = vmatprep.mubr.f32.mxu0 %v657
    %944 = vmatmul.mubr.f32.gmra.mrb[0].mxu0 %v655
    %v945 = vpop.f32.mrb[0].mxu0
    %v946 = vadd.f32 %v875, %v945
    %v947 = vpop.f32.mrb[0].mxu0
    %v948 = vadd.f32 %v877, %v947
    %949 = vdwg.mxu0
    %950 = vmatprep.subr.mxu0 %v113
    %951 = vmatpush1.msra.mxu0 %v112
    %952 = vmatprep.subr.mxu0 %v117
    %953 = vmatpush1.msra.mxu0 %v116
    %954 = vmatprep.subr.mxu0 %v121
    %955 = vmatpush1.msra.mxu0 %v120
    %956 = vmatprep.subr.mxu0 %v125
    %957 = vmatpush1.msra.mxu0 %v124
    %958 = vmatprep.subr.mxu0 %v129
    %959 = vmatpush1.msra.mxu0 %v128
    %960 = vmatprep.subr.mxu0 %v133
    %961 = vmatpush1.msra.mxu0 %v132
    %962 = vmatprep.subr.mxu0 %v137
    %963 = vmatpush1.msra.mxu0 %v136
    %964 = vmatprep.subr.mxu0 %v141
    %965 = vmatpush1.msra.mxu0 %v140
    %966 = vmatprep.subr.mxu0 %v145
    %967 = vmatpush1.msra.mxu0 %v144
    %968 = vmatprep.subr.mxu0 %v149
    %969 = vmatpush1.msra.mxu0 %v148
    %970 = vmatprep.subr.mxu0 %v153
    %971 = vmatpush1.msra.mxu0 %v152
    %972 = vmatprep.subr.mxu0 %v157
    %973 = vmatpush1.msra.mxu0 %v156
    %974 = vmatprep.subr.mxu0 %v161
    %975 = vmatpush1.msra.mxu0 %v160
    %976 = vmatprep.subr.mxu0 %v165
    %977 = vmatpush1.msra.mxu0 %v164
    %978 = vmatprep.subr.mxu0 %v169
    %979 = vmatpush1.msra.mxu0 %v168
    %980 = vmatprep.subr.mxu0 %v173
    %981 = vmatpush1.msra.mxu0 %v172
    %982 = vmatprep.subr.mxu0 %v177
    %983 = vmatpush1.msra.mxu0 %v176
    %984 = vmatprep.subr.mxu0 %v181
    %985 = vmatpush1.msra.mxu0 %v180
    %986 = vmatprep.subr.mxu0 %v185
    %987 = vmatpush1.msra.mxu0 %v184
    %988 = vmatprep.subr.mxu0 %v189
    %989 = vmatpush1.msra.mxu0 %v188
    %990 = vmatprep.subr.mxu0 %v193
    %991 = vmatpush1.msra.mxu0 %v192
    %992 = vmatprep.subr.mxu0 %v197
    %993 = vmatpush1.msra.mxu0 %v196
    %994 = vmatprep.subr.mxu0 %v201
    %995 = vmatpush1.msra.mxu0 %v200
    %996 = vmatprep.subr.mxu0 %v205
    %997 = vmatpush1.msra.mxu0 %v204
    %998 = vmatprep.subr.mxu0 %v209
    %999 = vmatpush1.msra.mxu0 %v208
    %1000 = vmatprep.subr.mxu0 %v213
    %1001 = vmatpush1.msra.mxu0 %v212
    %1002 = vmatprep.subr.mxu0 %v217
    %1003 = vmatpush1.msra.mxu0 %v216
    %1004 = vmatprep.subr.mxu0 %v221
    %1005 = vmatpush1.msra.mxu0 %v220
    %1006 = vmatprep.subr.mxu0 %v225
    %1007 = vmatpush1.msra.mxu0 %v224
    %1008 = vmatprep.subr.mxu0 %v229
    %1009 = vmatpush1.msra.mxu0 %v228
    %1010 = vmatprep.subr.mxu0 %v233
    %1011 = vmatpush1.msra.mxu0 %v232
    %1012 = vmatprep.subr.mxu0 %v237
    %1013 = vmatpush1.msra.mxu0 %v236
    %1014 = vmatprep.mubr.f32.mxu0 %v639
    %1015 = vmatmul.mubr.f32.gmra.mrb[0].mxu0 %v631
    %v1016 = vpop.f32.mrb[0].mxu0
    %v1017 = vadd.f32 0.0, %v1016
    %v1018 = vpop.f32.mrb[0].mxu0
    %v1019 = vadd.f32 0.0, %v1018
    %1020 = vdwg.mxu0
    %1021 = vmatprep.subr.mxu0 %v241
    %1022 = vmatpush1.msra.mxu0 %v240
    %1023 = vmatprep.subr.mxu0 %v245
    %1024 = vmatpush1.msra.mxu0 %v244
    %1025 = vmatprep.subr.mxu0 %v249
    %1026 = vmatpush1.msra.mxu0 %v248
    %1027 = vmatprep.subr.mxu0 %v253
    %1028 = vmatpush1.msra.mxu0 %v252
    %1029 = vmatprep.subr.mxu0 %v257
    %1030 = vmatpush1.msra.mxu0 %v256
    %1031 = vmatprep.subr.mxu0 %v261
    %1032 = vmatpush1.msra.mxu0 %v260
    %1033 = vmatprep.subr.mxu0 %v265
    %1034 = vmatpush1.msra.mxu0 %v264
    %1035 = vmatprep.subr.mxu0 %v269
    %1036 = vmatpush1.msra.mxu0 %v268
    %1037 = vmatprep.subr.mxu0 %v273
    %1038 = vmatpush1.msra.mxu0 %v272
    %1039 = vmatprep.subr.mxu0 %v277
    %1040 = vmatpush1.msra.mxu0 %v276
    %1041 = vmatprep.subr.mxu0 %v281
    %1042 = vmatpush1.msra.mxu0 %v280
    %1043 = vmatprep.subr.mxu0 %v285
    %1044 = vmatpush1.msra.mxu0 %v284
    %1045 = vmatprep.subr.mxu0 %v289
    %1046 = vmatpush1.msra.mxu0 %v288
    %1047 = vmatprep.subr.mxu0 %v293
    %1048 = vmatpush1.msra.mxu0 %v292
    %1049 = vmatprep.subr.mxu0 %v297
    %1050 = vmatpush1.msra.mxu0 %v296
    %1051 = vmatprep.subr.mxu0 %v301
    %1052 = vmatpush1.msra.mxu0 %v300
    %1053 = vmatprep.subr.mxu0 %v305
    %1054 = vmatpush1.msra.mxu0 %v304
    %1055 = vmatprep.subr.mxu0 %v309
    %1056 = vmatpush1.msra.mxu0 %v308
    %1057 = vmatprep.subr.mxu0 %v313
    %1058 = vmatpush1.msra.mxu0 %v312
    %1059 = vmatprep.subr.mxu0 %v317
    %1060 = vmatpush1.msra.mxu0 %v316
    %1061 = vmatprep.subr.mxu0 %v321
    %1062 = vmatpush1.msra.mxu0 %v320
    %1063 = vmatprep.subr.mxu0 %v325
    %1064 = vmatpush1.msra.mxu0 %v324
    %1065 = vmatprep.subr.mxu0 %v329
    %1066 = vmatpush1.msra.mxu0 %v328
    %1067 = vmatprep.subr.mxu0 %v333
    %1068 = vmatpush1.msra.mxu0 %v332
    %1069 = vmatprep.subr.mxu0 %v337
    %1070 = vmatpush1.msra.mxu0 %v336
    %1071 = vmatprep.subr.mxu0 %v341
    %1072 = vmatpush1.msra.mxu0 %v340
    %1073 = vmatprep.subr.mxu0 %v345
    %1074 = vmatpush1.msra.mxu0 %v344
    %1075 = vmatprep.subr.mxu0 %v349
    %1076 = vmatpush1.msra.mxu0 %v348
    %1077 = vmatprep.subr.mxu0 %v353
    %1078 = vmatpush1.msra.mxu0 %v352
    %1079 = vmatprep.subr.mxu0 %v357
    %1080 = vmatpush1.msra.mxu0 %v356
    %1081 = vmatprep.subr.mxu0 %v361
    %1082 = vmatpush1.msra.mxu0 %v360
    %1083 = vmatprep.subr.mxu0 %v365
    %1084 = vmatpush1.msra.mxu0 %v364
    %1085 = vmatprep.mubr.f32.mxu0 %v640
    %1086 = vmatmul.mubr.f32.gmra.mrb[0].mxu0 %v638
    %v1087 = vpop.f32.mrb[0].mxu0
    %v1088 = vadd.f32 %v1017, %v1087
    %v1089 = vpop.f32.mrb[0].mxu0
    %v1090 = vadd.f32 %v1019, %v1089
    %1091 = vdwg.mxu0
    %1092 = vmatprep.subr.mxu0 %v369
    %1093 = vmatpush1.msra.mxu0 %v368
    %1094 = vmatprep.subr.mxu0 %v373
    %1095 = vmatpush1.msra.mxu0 %v372
    %1096 = vmatprep.subr.mxu0 %v377
    %1097 = vmatpush1.msra.mxu0 %v376
    %1098 = vmatprep.subr.mxu0 %v381
    %1099 = vmatpush1.msra.mxu0 %v380
    %1100 = vmatprep.subr.mxu0 %v385
    %1101 = vmatpush1.msra.mxu0 %v384
    %1102 = vmatprep.subr.mxu0 %v389
    %1103 = vmatpush1.msra.mxu0 %v388
    %1104 = vmatprep.subr.mxu0 %v393
    %1105 = vmatpush1.msra.mxu0 %v392
    %1106 = vmatprep.subr.mxu0 %v397
    %1107 = vmatpush1.msra.mxu0 %v396
    %1108 = vmatprep.subr.mxu0 %v401
    %1109 = vmatpush1.msra.mxu0 %v400
    %1110 = vmatprep.subr.mxu0 %v405
    %1111 = vmatpush1.msra.mxu0 %v404
    %1112 = vmatprep.subr.mxu0 %v409
    %1113 = vmatpush1.msra.mxu0 %v408
    %1114 = vmatprep.subr.mxu0 %v413
    %1115 = vmatpush1.msra.mxu0 %v412
    %1116 = vmatprep.subr.mxu0 %v417
    %1117 = vmatpush1.msra.mxu0 %v416
    %1118 = vmatprep.subr.mxu0 %v421
    %1119 = vmatpush1.msra.mxu0 %v420
    %1120 = vmatprep.subr.mxu0 %v425
    %1121 = vmatpush1.msra.mxu0 %v424
    %1122 = vmatprep.subr.mxu0 %v429
    %1123 = vmatpush1.msra.mxu0 %v428
    %1124 = vmatprep.subr.mxu0 %v433
    %1125 = vmatpush1.msra.mxu0 %v432
    %1126 = vmatprep.subr.mxu0 %v437
    %1127 = vmatpush1.msra.mxu0 %v436
    %1128 = vmatprep.subr.mxu0 %v441
    %1129 = vmatpush1.msra.mxu0 %v440
    %1130 = vmatprep.subr.mxu0 %v445
    %1131 = vmatpush1.msra.mxu0 %v444
    %1132 = vmatprep.subr.mxu0 %v449
    %1133 = vmatpush1.msra.mxu0 %v448
    %1134 = vmatprep.subr.mxu0 %v453
    %1135 = vmatpush1.msra.mxu0 %v452
    %1136 = vmatprep.subr.mxu0 %v457
    %1137 = vmatpush1.msra.mxu0 %v456
    %1138 = vmatprep.subr.mxu0 %v461
    %1139 = vmatpush1.msra.mxu0 %v460
    %1140 = vmatprep.subr.mxu0 %v465
    %1141 = vmatpush1.msra.mxu0 %v464
    %1142 = vmatprep.subr.mxu0 %v469
    %1143 = vmatpush1.msra.mxu0 %v468
    %1144 = vmatprep.subr.mxu0 %v473
    %1145 = vmatpush1.msra.mxu0 %v472
    %1146 = vmatprep.subr.mxu0 %v477
    %1147 = vmatpush1.msra.mxu0 %v476
    %1148 = vmatprep.subr.mxu0 %v481
    %1149 = vmatpush1.msra.mxu0 %v480
    %1150 = vmatprep.subr.mxu0 %v485
    %1151 = vmatpush1.msra.mxu0 %v484
    %1152 = vmatprep.subr.mxu0 %v489
    %1153 = vmatpush1.msra.mxu0 %v488
    %1154 = vmatprep.subr.mxu0 %v493
    %1155 = vmatpush1.msra.mxu0 %v492
    %1156 = vmatprep.mubr.f32.mxu0 %v656
    %1157 = vmatmul.mubr.f32.gmra.mrb[0].mxu0 %v648
    %v1158 = vpop.f32.mrb[0].mxu0
    %v1159 = vadd.f32 %v1088, %v1158
    %v1160 = vpop.f32.mrb[0].mxu0
    %v1161 = vadd.f32 %v1090, %v1160
    %1162 = vdwg.mxu0
    %1163 = vmatprep.subr.mxu0 %v497
    %1164 = vmatpush1.msra.mxu0 %v496
    %1165 = vmatprep.subr.mxu0 %v501
    %1166 = vmatpush1.msra.mxu0 %v500
    %1167 = vmatprep.subr.mxu0 %v505
    %1168 = vmatpush1.msra.mxu0 %v504
    %1169 = vmatprep.subr.mxu0 %v509
    %1170 = vmatpush1.msra.mxu0 %v508
    %1171 = vmatprep.subr.mxu0 %v513
    %1172 = vmatpush1.msra.mxu0 %v512
    %1173 = vmatprep.subr.mxu0 %v517
    %1174 = vmatpush1.msra.mxu0 %v516
    %1175 = vmatprep.subr.mxu0 %v521
    %1176 = vmatpush1.msra.mxu0 %v520
    %1177 = vmatprep.subr.mxu0 %v525
    %1178 = vmatpush1.msra.mxu0 %v524
    %1179 = vmatprep.subr.mxu0 %v529
    %1180 = vmatpush1.msra.mxu0 %v528
    %1181 = vmatprep.subr.mxu0 %v533
    %1182 = vmatpush1.msra.mxu0 %v532
    %1183 = vmatprep.subr.mxu0 %v537
    %1184 = vmatpush1.msra.mxu0 %v536
    %1185 = vmatprep.subr.mxu0 %v541
    %1186 = vmatpush1.msra.mxu0 %v540
    %1187 = vmatprep.subr.mxu0 %v545
    %1188 = vmatpush1.msra.mxu0 %v544
    %1189 = vmatprep.subr.mxu0 %v549
    %1190 = vmatpush1.msra.mxu0 %v548
    %1191 = vmatprep.subr.mxu0 %v553
    %1192 = vmatpush1.msra.mxu0 %v552
    %1193 = vmatprep.subr.mxu0 %v557
    %1194 = vmatpush1.msra.mxu0 %v556
    %1195 = vmatprep.subr.mxu0 %v561
    %1196 = vmatpush1.msra.mxu0 %v560
    %1197 = vmatprep.subr.mxu0 %v565
    %1198 = vmatpush1.msra.mxu0 %v564
    %1199 = vmatprep.subr.mxu0 %v569
    %1200 = vmatpush1.msra.mxu0 %v568
    %1201 = vmatprep.subr.mxu0 %v573
    %1202 = vmatpush1.msra.mxu0 %v572
    %1203 = vmatprep.subr.mxu0 %v577
    %1204 = vmatpush1.msra.mxu0 %v576
    %1205 = vmatprep.subr.mxu0 %v581
    %1206 = vmatpush1.msra.mxu0 %v580
    %1207 = vmatprep.subr.mxu0 %v585
    %1208 = vmatpush1.msra.mxu0 %v584
    %1209 = vmatprep.subr.mxu0 %v589
    %1210 = vmatpush1.msra.mxu0 %v588
    %1211 = vmatprep.subr.mxu0 %v593
    %1212 = vmatpush1.msra.mxu0 %v592
    %1213 = vmatprep.subr.mxu0 %v597
    %1214 = vmatpush1.msra.mxu0 %v596
    %1215 = vmatprep.subr.mxu0 %v601
    %1216 = vmatpush1.msra.mxu0 %v600
    %1217 = vmatprep.subr.mxu0 %v605
    %1218 = vmatpush1.msra.mxu0 %v604
    %1219 = vmatprep.subr.mxu0 %v609
    %1220 = vmatpush1.msra.mxu0 %v608
    %1221 = vmatprep.subr.mxu0 %v613
    %1222 = vmatpush1.msra.mxu0 %v612
    %1223 = vmatprep.subr.mxu0 %v617
    %1224 = vmatpush1.msra.mxu0 %v616
    %1225 = vmatprep.subr.mxu0 %v621
    %1226 = vmatpush1.msra.mxu0 %v620
    %1227 = vmatprep.mubr.f32.mxu0 %v657
    %1228 = vmatmul.mubr.f32.gmra.mrb[0].mxu0 %v655
    %v1229 = vpop.f32.mrb[0].mxu0
    %v1230 = vadd.f32 %v1159, %v1229
    %v1231 = vpop.f32.mrb[0].mxu0
    %v1232 = vadd.f32 %v1161, %v1231
    %1233 = vdwg.mxu0
    %vm1234 = vcmp.ge.f32.partialorder %v946, 0.0
    %vm1235 = vcmp.ge.f32.partialorder %v948, 0.0
    %vm1236 = vcmp.ge.f32.partialorder %v1230, 0.0
    %vm1237 = vcmp.ge.f32.partialorder %v1232, 0.0
    %v1238 = vmul.f32 %v946, 0.2
    %v1239 = vmul.f32 %v948, 0.2
    %v1240 = vmul.f32 %v1230, 0.2
    %v1241 = vmul.f32 %v1232, 0.2
    %v1242 = vsel %vm1234, %v946, %v1238
    %v1243 = vsel %vm1235, %v948, %v1239
    %v1244 = vsel %vm1236, %v1230, %v1240
    %v1245 = vsel %vm1237, %v1232, %v1241
    %v1246 = vld [vmem:[#allocation7] sm:$0xff]
    %v1247 = vld [vmem:[#allocation7 + $0x8] sm:$0xff]
    %v1248 = vld [vmem:[#allocation7 + $0x10] sm:$0xff]
    %v1249 = vld [vmem:[#allocation7 + $0x18] sm:$0xff]
    %v1250 = vld [vmem:[#allocation7 + $0x20] sm:$0xff]
    %v1251 = vld [vmem:[#allocation7 + $0x28] sm:$0xff]
    %v1252 = vld [vmem:[#allocation7 + $0x30] sm:$0xff]
    %v1253 = vld [vmem:[#allocation7 + $0x38] sm:$0xff]
    %v1254 = vld [vmem:[#allocation7 + $0x40] sm:$0xff]
    %v1255 = vld [vmem:[#allocation7 + $0x48] sm:$0xff]
    %v1256 = vld [vmem:[#allocation7 + $0x50] sm:$0xff]
    %v1257 = vld [vmem:[#allocation7 + $0x58] sm:$0xff]
    %v1258 = vld [vmem:[#allocation7 + $0x60] sm:$0xff]
    %v1259 = vld [vmem:[#allocation7 + $0x68] sm:$0xff]
    %v1260 = vld [vmem:[#allocation7 + $0x70] sm:$0xff]
    %v1261 = vld [vmem:[#allocation7 + $0x78] sm:$0xff]
    %v1262 = vld [vmem:[#allocation7 + $0x80] sm:$0xff]
    %v1263 = vld [vmem:[#allocation7 + $0x88] sm:$0xff]
    %v1264 = vld [vmem:[#allocation7 + $0x90] sm:$0xff]
    %v1265 = vld [vmem:[#allocation7 + $0x98] sm:$0xff]
    %v1266 = vld [vmem:[#allocation7 + $0xa0] sm:$0xff]
    %v1267 = vld [vmem:[#allocation7 + $0xa8] sm:$0xff]
    %v1268 = vld [vmem:[#allocation7 + $0xb0] sm:$0xff]
    %v1269 = vld [vmem:[#allocation7 + $0xb8] sm:$0xff]
    %v1270 = vld [vmem:[#allocation7 + $0xc0] sm:$0xff]
    %v1271 = vld [vmem:[#allocation7 + $0xc8] sm:$0xff]
    %v1272 = vld [vmem:[#allocation7 + $0xd0] sm:$0xff]
    %v1273 = vld [vmem:[#allocation7 + $0xd8] sm:$0xff]
    %v1274 = vld [vmem:[#allocation7 + $0xe0] sm:$0xff]
    %v1275 = vld [vmem:[#allocation7 + $0xe8] sm:$0xff]
    %v1276 = vld [vmem:[#allocation7 + $0xf0] sm:$0xff]
    %v1277 = vld [vmem:[#allocation7 + $0xf8] sm:$0xff]
    %v1278 = vld [vmem:[#allocation7 + $0x100] sm:$0xff]
    %v1279 = vld [vmem:[#allocation7 + $0x108] sm:$0xff]
    %v1280 = vld [vmem:[#allocation7 + $0x110] sm:$0xff]
    %v1281 = vld [vmem:[#allocation7 + $0x118] sm:$0xff]
    %v1282 = vld [vmem:[#allocation7 + $0x120] sm:$0xff]
    %v1283 = vld [vmem:[#allocation7 + $0x128] sm:$0xff]
    %v1284 = vld [vmem:[#allocation7 + $0x130] sm:$0xff]
    %v1285 = vld [vmem:[#allocation7 + $0x138] sm:$0xff]
    %v1286 = vld [vmem:[#allocation7 + $0x140] sm:$0xff]
    %v1287 = vld [vmem:[#allocation7 + $0x148] sm:$0xff]
    %v1288 = vld [vmem:[#allocation7 + $0x150] sm:$0xff]
    %v1289 = vld [vmem:[#allocation7 + $0x158] sm:$0xff]
    %v1290 = vld [vmem:[#allocation7 + $0x160] sm:$0xff]
    %v1291 = vld [vmem:[#allocation7 + $0x168] sm:$0xff]
    %v1292 = vld [vmem:[#allocation7 + $0x170] sm:$0xff]
    %v1293 = vld [vmem:[#allocation7 + $0x178] sm:$0xff]
    %v1294 = vld [vmem:[#allocation7 + $0x180] sm:$0xff]
    %v1295 = vld [vmem:[#allocation7 + $0x188] sm:$0xff]
    %v1296 = vld [vmem:[#allocation7 + $0x190] sm:$0xff]
    %v1297 = vld [vmem:[#allocation7 + $0x198] sm:$0xff]
    %v1298 = vld [vmem:[#allocation7 + $0x1a0] sm:$0xff]
    %v1299 = vld [vmem:[#allocation7 + $0x1a8] sm:$0xff]
    %v1300 = vld [vmem:[#allocation7 + $0x1b0] sm:$0xff]
    %v1301 = vld [vmem:[#allocation7 + $0x1b8] sm:$0xff]
    %v1302 = vld [vmem:[#allocation7 + $0x1c0] sm:$0xff]
    %v1303 = vld [vmem:[#allocation7 + $0x1c8] sm:$0xff]
    %v1304 = vld [vmem:[#allocation7 + $0x1d0] sm:$0xff]
    %v1305 = vld [vmem:[#allocation7 + $0x1d8] sm:$0xff]
    %v1306 = vld [vmem:[#allocation7 + $0x1e0] sm:$0xff]
    %v1307 = vld [vmem:[#allocation7 + $0x1e8] sm:$0xff]
    %v1308 = vld [vmem:[#allocation7 + $0x1f0] sm:$0xff]
    %v1309 = vld [vmem:[#allocation7 + $0x1f8] sm:$0xff]
    %v1310 = vld [vmem:[#allocation7 + $0x200] sm:$0xff]
    %v1311 = vld [vmem:[#allocation7 + $0x208] sm:$0xff]
    %v1312 = vld [vmem:[#allocation7 + $0x210] sm:$0xff]
    %v1313 = vld [vmem:[#allocation7 + $0x218] sm:$0xff]
    %v1314 = vld [vmem:[#allocation7 + $0x220] sm:$0xff]
    %v1315 = vld [vmem:[#allocation7 + $0x228] sm:$0xff]
    %v1316 = vld [vmem:[#allocation7 + $0x230] sm:$0xff]
    %v1317 = vld [vmem:[#allocation7 + $0x238] sm:$0xff]
    %v1318 = vld [vmem:[#allocation7 + $0x240] sm:$0xff]
    %v1319 = vld [vmem:[#allocation7 + $0x248] sm:$0xff]
    %v1320 = vld [vmem:[#allocation7 + $0x250] sm:$0xff]
    %v1321 = vld [vmem:[#allocation7 + $0x258] sm:$0xff]
    %v1322 = vld [vmem:[#allocation7 + $0x260] sm:$0xff]
    %v1323 = vld [vmem:[#allocation7 + $0x268] sm:$0xff]
    %v1324 = vld [vmem:[#allocation7 + $0x270] sm:$0xff]
    %v1325 = vld [vmem:[#allocation7 + $0x278] sm:$0xff]
    %v1326 = vld [vmem:[#allocation7 + $0x280] sm:$0xff]
    %v1327 = vld [vmem:[#allocation7 + $0x288] sm:$0xff]
    %v1328 = vld [vmem:[#allocation7 + $0x290] sm:$0xff]
    %v1329 = vld [vmem:[#allocation7 + $0x298] sm:$0xff]
    %v1330 = vld [vmem:[#allocation7 + $0x2a0] sm:$0xff]
    %v1331 = vld [vmem:[#allocation7 + $0x2a8] sm:$0xff]
    %v1332 = vld [vmem:[#allocation7 + $0x2b0] sm:$0xff]
    %v1333 = vld [vmem:[#allocation7 + $0x2b8] sm:$0xff]
    %v1334 = vld [vmem:[#allocation7 + $0x2c0] sm:$0xff]
    %v1335 = vld [vmem:[#allocation7 + $0x2c8] sm:$0xff]
    %v1336 = vld [vmem:[#allocation7 + $0x2d0] sm:$0xff]
    %v1337 = vld [vmem:[#allocation7 + $0x2d8] sm:$0xff]
    %v1338 = vld [vmem:[#allocation7 + $0x2e0] sm:$0xff]
    %v1339 = vld [vmem:[#allocation7 + $0x2e8] sm:$0xff]
    %v1340 = vld [vmem:[#allocation7 + $0x2f0] sm:$0xff]
    %v1341 = vld [vmem:[#allocation7 + $0x2f8] sm:$0xff]
    %v1342 = vld [vmem:[#allocation7 + $0x300] sm:$0xff]
    %v1343 = vld [vmem:[#allocation7 + $0x308] sm:$0xff]
    %v1344 = vld [vmem:[#allocation7 + $0x310] sm:$0xff]
    %v1345 = vld [vmem:[#allocation7 + $0x318] sm:$0xff]
    %v1346 = vld [vmem:[#allocation7 + $0x320] sm:$0xff]
    %v1347 = vld [vmem:[#allocation7 + $0x328] sm:$0xff]
    %v1348 = vld [vmem:[#allocation7 + $0x330] sm:$0xff]
    %v1349 = vld [vmem:[#allocation7 + $0x338] sm:$0xff]
    %v1350 = vld [vmem:[#allocation7 + $0x340] sm:$0xff]
    %v1351 = vld [vmem:[#allocation7 + $0x348] sm:$0xff]
    %v1352 = vld [vmem:[#allocation7 + $0x350] sm:$0xff]
    %v1353 = vld [vmem:[#allocation7 + $0x358] sm:$0xff]
    %v1354 = vld [vmem:[#allocation7 + $0x360] sm:$0xff]
    %v1355 = vld [vmem:[#allocation7 + $0x368] sm:$0xff]
    %v1356 = vld [vmem:[#allocation7 + $0x370] sm:$0xff]
    %v1357 = vld [vmem:[#allocation7 + $0x378] sm:$0xff]
    %v1358 = vld [vmem:[#allocation7 + $0x380] sm:$0xff]
    %v1359 = vld [vmem:[#allocation7 + $0x388] sm:$0xff]
    %v1360 = vld [vmem:[#allocation7 + $0x390] sm:$0xff]
    %v1361 = vld [vmem:[#allocation7 + $0x398] sm:$0xff]
    %v1362 = vld [vmem:[#allocation7 + $0x3a0] sm:$0xff]
    %v1363 = vld [vmem:[#allocation7 + $0x3a8] sm:$0xff]
    %v1364 = vld [vmem:[#allocation7 + $0x3b0] sm:$0xff]
    %v1365 = vld [vmem:[#allocation7 + $0x3b8] sm:$0xff]
    %v1366 = vld [vmem:[#allocation7 + $0x3c0] sm:$0xff]
    %v1367 = vld [vmem:[#allocation7 + $0x3c8] sm:$0xff]
    %v1368 = vld [vmem:[#allocation7 + $0x3d0] sm:$0xff]
    %v1369 = vld [vmem:[#allocation7 + $0x3d8] sm:$0xff]
    %v1370 = vld [vmem:[#allocation7 + $0x3e0] sm:$0xff]
    %v1371 = vld [vmem:[#allocation7 + $0x3e8] sm:$0xff]
    %v1372 = vld [vmem:[#allocation7 + $0x3f0] sm:$0xff]
    %v1373 = vld [vmem:[#allocation7 + $0x3f8] sm:$0xff]
    %1374 = vmatprep.subr.mxu0 %v1247
    %1375 = vmatpush1.msra.mxu0 %v1246
    %1376 = vmatprep.subr.mxu0 %v1249
    %1377 = vmatpush1.msra.mxu0 %v1248
    %1378 = vmatprep.subr.mxu0 %v1251
    %1379 = vmatpush1.msra.mxu0 %v1250
    %1380 = vmatprep.subr.mxu0 %v1253
    %1381 = vmatpush1.msra.mxu0 %v1252
    %1382 = vmatprep.subr.mxu0 %v1255
    %1383 = vmatpush1.msra.mxu0 %v1254
    %1384 = vmatprep.subr.mxu0 %v1257
    %1385 = vmatpush1.msra.mxu0 %v1256
    %1386 = vmatprep.subr.mxu0 %v1259
    %1387 = vmatpush1.msra.mxu0 %v1258
    %1388 = vmatprep.subr.mxu0 %v1261
    %1389 = vmatpush1.msra.mxu0 %v1260
    %1390 = vmatprep.subr.mxu0 %v1263
    %1391 = vmatpush1.msra.mxu0 %v1262
    %1392 = vmatprep.subr.mxu0 %v1265
    %1393 = vmatpush1.msra.mxu0 %v1264
    %1394 = vmatprep.subr.mxu0 %v1267
    %1395 = vmatpush1.msra.mxu0 %v1266
    %1396 = vmatprep.subr.mxu0 %v1269
    %1397 = vmatpush1.msra.mxu0 %v1268
    %1398 = vmatprep.subr.mxu0 %v1271
    %1399 = vmatpush1.msra.mxu0 %v1270
    %1400 = vmatprep.subr.mxu0 %v1273
    %1401 = vmatpush1.msra.mxu0 %v1272
    %1402 = vmatprep.subr.mxu0 %v1275
    %1403 = vmatpush1.msra.mxu0 %v1274
    %1404 = vmatprep.subr.mxu0 %v1277
    %1405 = vmatpush1.msra.mxu0 %v1276
    %1406 = vmatprep.subr.mxu0 %v1279
    %1407 = vmatpush1.msra.mxu0 %v1278
    %1408 = vmatprep.subr.mxu0 %v1281
    %1409 = vmatpush1.msra.mxu0 %v1280
    %1410 = vmatprep.subr.mxu0 %v1283
    %1411 = vmatpush1.msra.mxu0 %v1282
    %1412 = vmatprep.subr.mxu0 %v1285
    %1413 = vmatpush1.msra.mxu0 %v1284
    %1414 = vmatprep.subr.mxu0 %v1287
    %1415 = vmatpush1.msra.mxu0 %v1286
    %1416 = vmatprep.subr.mxu0 %v1289
    %1417 = vmatpush1.msra.mxu0 %v1288
    %1418 = vmatprep.subr.mxu0 %v1291
    %1419 = vmatpush1.msra.mxu0 %v1290
    %1420 = vmatprep.subr.mxu0 %v1293
    %1421 = vmatpush1.msra.mxu0 %v1292
    %1422 = vmatprep.subr.mxu0 %v1295
    %1423 = vmatpush1.msra.mxu0 %v1294
    %1424 = vmatprep.subr.mxu0 %v1297
    %1425 = vmatpush1.msra.mxu0 %v1296
    %1426 = vmatprep.subr.mxu0 %v1299
    %1427 = vmatpush1.msra.mxu0 %v1298
    %1428 = vmatprep.subr.mxu0 %v1301
    %1429 = vmatpush1.msra.mxu0 %v1300
    %1430 = vmatprep.subr.mxu0 %v1303
    %1431 = vmatpush1.msra.mxu0 %v1302
    %1432 = vmatprep.subr.mxu0 %v1305
    %1433 = vmatpush1.msra.mxu0 %v1304
    %1434 = vmatprep.subr.mxu0 %v1307
    %1435 = vmatpush1.msra.mxu0 %v1306
    %1436 = vmatprep.subr.mxu0 %v1309
    %1437 = vmatpush1.msra.mxu0 %v1308
    %1438 = vmatprep.mubr.f32.mxu0 %v1243
    %1439 = vmatmul.mubr.f32.gmra.mrb[0].mxu0 %v1242
    %v1440 = vpop.f32.mrb[0].mxu0
    %v1441 = vadd.f32 0.0, %v1440
    %v1442 = vpop.f32.mrb[0].mxu0
    %v1443 = vadd.f32 0.0, %v1442
    %1444 = vdwg.mxu0
    %1445 = vmatprep.subr.mxu0 %v1311
    %1446 = vmatpush1.msra.mxu0 %v1310
    %1447 = vmatprep.subr.mxu0 %v1313
    %1448 = vmatpush1.msra.mxu0 %v1312
    %1449 = vmatprep.subr.mxu0 %v1315
    %1450 = vmatpush1.msra.mxu0 %v1314
    %1451 = vmatprep.subr.mxu0 %v1317
    %1452 = vmatpush1.msra.mxu0 %v1316
    %1453 = vmatprep.subr.mxu0 %v1319
    %1454 = vmatpush1.msra.mxu0 %v1318
    %1455 = vmatprep.subr.mxu0 %v1321
    %1456 = vmatpush1.msra.mxu0 %v1320
    %1457 = vmatprep.subr.mxu0 %v1323
    %1458 = vmatpush1.msra.mxu0 %v1322
    %1459 = vmatprep.subr.mxu0 %v1325
    %1460 = vmatpush1.msra.mxu0 %v1324
    %1461 = vmatprep.subr.mxu0 %v1327
    %1462 = vmatpush1.msra.mxu0 %v1326
    %1463 = vmatprep.subr.mxu0 %v1329
    %1464 = vmatpush1.msra.mxu0 %v1328
    %1465 = vmatprep.subr.mxu0 %v1331
    %1466 = vmatpush1.msra.mxu0 %v1330
    %1467 = vmatprep.subr.mxu0 %v1333
    %1468 = vmatpush1.msra.mxu0 %v1332
    %1469 = vmatprep.subr.mxu0 %v1335
    %1470 = vmatpush1.msra.mxu0 %v1334
    %1471 = vmatprep.subr.mxu0 %v1337
    %1472 = vmatpush1.msra.mxu0 %v1336
    %1473 = vmatprep.subr.mxu0 %v1339
    %1474 = vmatpush1.msra.mxu0 %v1338
    %1475 = vmatprep.subr.mxu0 %v1341
    %1476 = vmatpush1.msra.mxu0 %v1340
    %1477 = vmatprep.subr.mxu0 %v1343
    %1478 = vmatpush1.msra.mxu0 %v1342
    %1479 = vmatprep.subr.mxu0 %v1345
    %1480 = vmatpush1.msra.mxu0 %v1344
    %1481 = vmatprep.subr.mxu0 %v1347
    %1482 = vmatpush1.msra.mxu0 %v1346
    %1483 = vmatprep.subr.mxu0 %v1349
    %1484 = vmatpush1.msra.mxu0 %v1348
    %1485 = vmatprep.subr.mxu0 %v1351
    %1486 = vmatpush1.msra.mxu0 %v1350
    %1487 = vmatprep.subr.mxu0 %v1353
    %1488 = vmatpush1.msra.mxu0 %v1352
    %1489 = vmatprep.subr.mxu0 %v1355
    %1490 = vmatpush1.msra.mxu0 %v1354
    %1491 = vmatprep.subr.mxu0 %v1357
    %1492 = vmatpush1.msra.mxu0 %v1356
    %1493 = vmatprep.subr.mxu0 %v1359
    %1494 = vmatpush1.msra.mxu0 %v1358
    %1495 = vmatprep.subr.mxu0 %v1361
    %1496 = vmatpush1.msra.mxu0 %v1360
    %1497 = vmatprep.subr.mxu0 %v1363
    %1498 = vmatpush1.msra.mxu0 %v1362
    %1499 = vmatprep.subr.mxu0 %v1365
    %1500 = vmatpush1.msra.mxu0 %v1364
    %1501 = vmatprep.subr.mxu0 %v1367
    %1502 = vmatpush1.msra.mxu0 %v1366
    %1503 = vmatprep.subr.mxu0 %v1369
    %1504 = vmatpush1.msra.mxu0 %v1368
    %1505 = vmatprep.subr.mxu0 %v1371
    %1506 = vmatpush1.msra.mxu0 %v1370
    %1507 = vmatprep.subr.mxu0 %v1373
    %1508 = vmatpush1.msra.mxu0 %v1372
    %1509 = vmatprep.mubr.f32.mxu0 %v1245
    %1510 = vmatmul.mubr.f32.gmra.mrb[0].mxu0 %v1244
    %v1511 = vpop.f32.mrb[0].mxu0
    %v1512 = vadd.f32 %v1441, %v1511
    %v1513 = vpop.f32.mrb[0].mxu0
    %v1514 = vadd.f32 %v1443, %v1513
    %1515 = vdwg.mxu0
    %v1516 = vld [vmem:[%s5] sm:$0xff]
    %v1517 = vld [vmem:[%s5 + $0x8] sm:$0xff]
    %v1518 = vld [vmem:[%s5 + $0x10] sm:$0xff]
    %v1519 = vld [vmem:[%s5 + $0x18] sm:$0xff]
    %v1520 = vld [vmem:[%s5 + $0x20] sm:$0xff]
    %v1521 = vld [vmem:[%s5 + $0x28] sm:$0xff]
    %v1522 = vld [vmem:[%s5 + $0x30] sm:$0xff]
    %v1523 = vld [vmem:[%s5 + $0x38] sm:$0xff]
    %v1524 = vld [vmem:[%s5 + $0x40] sm:$0xff]
    %v1525 = vld [vmem:[%s5 + $0x48] sm:$0xff]
    %v1526 = vld [vmem:[%s5 + $0x50] sm:$0xff]
    %v1527 = vld [vmem:[%s5 + $0x58] sm:$0xff]
    %v1528 = vld [vmem:[%s5 + $0x60] sm:$0xff]
    %v1529 = vld [vmem:[%s5 + $0x68] sm:$0xff]
    %v1530 = vld [vmem:[%s5 + $0x70] sm:$0xff]
    %v1531 = vld [vmem:[%s5 + $0x78] sm:$0xff]
    %v1532 = vld [vmem:[%s5 + $0x80] sm:$0xff]
    %v1533 = vld [vmem:[%s5 + $0x88] sm:$0xff]
    %v1534 = vld [vmem:[%s5 + $0x90] sm:$0xff]
    %v1535 = vld [vmem:[%s5 + $0x98] sm:$0xff]
    %v1536 = vld [vmem:[%s5 + $0xa0] sm:$0xff]
    %v1537 = vld [vmem:[%s5 + $0xa8] sm:$0xff]
    %v1538 = vld [vmem:[%s5 + $0xb0] sm:$0xff]
    %v1539 = vld [vmem:[%s5 + $0xb8] sm:$0xff]
    %v1540 = vld [vmem:[%s5 + $0xc0] sm:$0xff]
    %v1541 = vld [vmem:[%s5 + $0xc8] sm:$0xff]
    %v1542 = vld [vmem:[%s5 + $0xd0] sm:$0xff]
    %v1543 = vld [vmem:[%s5 + $0xd8] sm:$0xff]
    %v1544 = vld [vmem:[%s5 + $0xe0] sm:$0xff]
    %v1545 = vld [vmem:[%s5 + $0xe8] sm:$0xff]
    %v1546 = vld [vmem:[%s5 + $0xf0] sm:$0xff]
    %v1547 = vld [vmem:[%s5 + $0xf8] sm:$0xff]
    %v1548 = vld [vmem:[#allocation11] sm:$0xff]
    %v1549 = vld [vmem:[#allocation11 + $0x8] sm:$0xff]
    %v1550 = vld [vmem:[#allocation11 + $0x10] sm:$0xff]
    %v1551 = vld [vmem:[#allocation11 + $0x18] sm:$0xff]
    %vm1552 = vcmask 1041408
    %v1553 = vsel %vm1552, %v1512, 0.0
    %v1554 = vrot.slane %v1553, 4
    %v1555 = vadd.f32 %v1553, %v1554
    %v1556 = vrot.slane %v1555, 2
    %v1557 = vadd.f32 %v1555, %v1556
    %v1558 = vrot.slane %v1557, 1
    %v1559 = vadd.f32 %v1557, %v1558
    %v1560 = vsel %vm1552, %v1514, 0.0
    %v1561 = vrot.slane %v1560, 4
    %v1562 = vadd.f32 %v1560, %v1561
    %v1563 = vrot.slane %v1562, 2
    %v1564 = vadd.f32 %v1562, %v1563
    %v1565 = vrot.slane %v1564, 1
    %v1566 = vadd.f32 %v1564, %v1565
    %1567 = vmatprep.subr.mxu0 0.0
    %1568 = vmatpush1.msra.mxu0 %v1516
    %1569 = vmatprep.subr.mxu0 0.0
    %1570 = vmatpush1.msra.mxu0 %v1517
    %1571 = vmatprep.subr.mxu0 0.0
    %1572 = vmatpush1.msra.mxu0 %v1518
    %1573 = vmatprep.subr.mxu0 0.0
    %1574 = vmatpush1.msra.mxu0 %v1519
    %1575 = vmatprep.subr.mxu0 0.0
    %1576 = vmatpush1.msra.mxu0 %v1520
    %1577 = vmatprep.subr.mxu0 0.0
    %1578 = vmatpush1.msra.mxu0 %v1521
    %1579 = vmatprep.subr.mxu0 0.0
    %1580 = vmatpush1.msra.mxu0 %v1522
    %1581 = vmatprep.subr.mxu0 0.0
    %1582 = vmatpush1.msra.mxu0 %v1523
    %1583 = vmatprep.subr.mxu0 0.0
    %1584 = vmatpush1.msra.mxu0 %v1524
    %1585 = vmatprep.subr.mxu0 0.0
    %1586 = vmatpush1.msra.mxu0 %v1525
    %1587 = vmatprep.subr.mxu0 0.0
    %1588 = vmatpush1.msra.mxu0 %v1526
    %1589 = vmatprep.subr.mxu0 0.0
    %1590 = vmatpush1.msra.mxu0 %v1527
    %1591 = vmatprep.subr.mxu0 0.0
    %1592 = vmatpush1.msra.mxu0 %v1528
    %1593 = vmatprep.subr.mxu0 0.0
    %1594 = vmatpush1.msra.mxu0 %v1529
    %1595 = vmatprep.subr.mxu0 0.0
    %1596 = vmatpush1.msra.mxu0 %v1530
    %1597 = vmatprep.subr.mxu0 0.0
    %1598 = vmatpush1.msra.mxu0 %v1531
    %1599 = vmatprep.subr.mxu0 0.0
    %1600 = vmatpush1.msra.mxu0 %v1532
    %1601 = vmatprep.subr.mxu0 0.0
    %1602 = vmatpush1.msra.mxu0 %v1533
    %1603 = vmatprep.subr.mxu0 0.0
    %1604 = vmatpush1.msra.mxu0 %v1534
    %1605 = vmatprep.subr.mxu0 0.0
    %1606 = vmatpush1.msra.mxu0 %v1535
    %1607 = vmatprep.subr.mxu0 0.0
    %1608 = vmatpush1.msra.mxu0 %v1536
    %1609 = vmatprep.subr.mxu0 0.0
    %1610 = vmatpush1.msra.mxu0 %v1537
    %1611 = vmatprep.subr.mxu0 0.0
    %1612 = vmatpush1.msra.mxu0 %v1538
    %1613 = vmatprep.subr.mxu0 0.0
    %1614 = vmatpush1.msra.mxu0 %v1539
    %1615 = vmatprep.subr.mxu0 0.0
    %1616 = vmatpush1.msra.mxu0 %v1540
    %1617 = vmatprep.subr.mxu0 0.0
    %1618 = vmatpush1.msra.mxu0 %v1541
    %1619 = vmatprep.subr.mxu0 0.0
    %1620 = vmatpush1.msra.mxu0 %v1542
    %1621 = vmatprep.subr.mxu0 0.0
    %1622 = vmatpush1.msra.mxu0 %v1543
    %1623 = vmatprep.subr.mxu0 0.0
    %1624 = vmatpush1.msra.mxu0 %v1544
    %1625 = vmatprep.subr.mxu0 0.0
    %1626 = vmatpush1.msra.mxu0 %v1545
    %1627 = vmatprep.subr.mxu0 0.0
    %1628 = vmatpush1.msra.mxu0 %v1546
    %1629 = vmatprep.subr.mxu0 0.0
    %1630 = vmatpush1.msra.mxu0 %v1547
    %1631 = vmatprep.mubr.f32.mxu0 %v1566
    %1632 = vmatmul.mubr.f32.gmra.mrb[0].mxu0 %v1559
    %v1633 = vpop.f32.mrb[0].mxu0
    %v1634 = vadd.f32 0.0, %v1633
    %v1635 = vpop.f32.mrb[0].mxu0
    %1636 = vdwg.mxu0
    %v1637 = vmul.f32 %v1634, 0.03125
    %vm1638 = vcmask 130048
    %v1640 = vsel %vm1638, %v1637, 0
    %1642 = vmatprep.subr.mxu0 %v1549
    %1643 = vmatpush1.msra.mxu0 %v1548
    %1644 = vmatprep.subr.mxu0 %v1551
    %1645 = vmatpush1.msra.mxu0 %v1550
    %1646 = vmatprep.subr.mxu0 0.0
    %1647 = vmatpush1.msra.mxu0 0.0
    %1648 = vmatprep.subr.mxu0 0.0
    %1649 = vmatpush1.msra.mxu0 0.0
    %1650 = vmatprep.subr.mxu0 0.0
    %1651 = vmatpush1.msra.mxu0 0.0
    %1652 = vmatprep.subr.mxu0 0.0
    %1653 = vmatpush1.msra.mxu0 0.0
    %1654 = vmatprep.subr.mxu0 0.0
    %1655 = vmatpush1.msra.mxu0 0.0
    %1656 = vmatprep.subr.mxu0 0.0
    %1657 = vmatpush1.msra.mxu0 0.0
    %1658 = vmatprep.subr.mxu0 0.0
    %1659 = vmatpush1.msra.mxu0 0.0
    %1660 = vmatprep.subr.mxu0 0.0
    %1661 = vmatpush1.msra.mxu0 0.0
    %1662 = vmatprep.subr.mxu0 0.0
    %1663 = vmatpush1.msra.mxu0 0.0
    %1664 = vmatprep.subr.mxu0 0.0
    %1665 = vmatpush1.msra.mxu0 0.0
    %1666 = vmatprep.subr.mxu0 0.0
    %1667 = vmatpush1.msra.mxu0 0.0
    %1668 = vmatprep.subr.mxu0 0.0
    %1669 = vmatpush1.msra.mxu0 0.0
    %1670 = vmatprep.subr.mxu0 0.0
    %1671 = vmatpush1.msra.mxu0 0.0
    %1672 = vmatprep.subr.mxu0 0.0
    %1673 = vmatpush1.msra.mxu0 0.0
    %1674 = vmatprep.subr.mxu0 0.0
    %1675 = vmatpush1.msra.mxu0 0.0
    %1676 = vmatprep.subr.mxu0 0.0
    %1677 = vmatpush1.msra.mxu0 0.0
    %1678 = vmatprep.subr.mxu0 0.0
    %1679 = vmatpush1.msra.mxu0 0.0
    %1680 = vmatprep.subr.mxu0 0.0
    %1681 = vmatpush1.msra.mxu0 0.0
    %1682 = vmatprep.subr.mxu0 0.0
    %1683 = vmatpush1.msra.mxu0 0.0
    %1684 = vmatprep.subr.mxu0 0.0
    %1685 = vmatpush1.msra.mxu0 0.0
    %1686 = vmatprep.subr.mxu0 0.0
    %1687 = vmatpush1.msra.mxu0 0.0
    %1688 = vmatprep.subr.mxu0 0.0
    %1689 = vmatpush1.msra.mxu0 0.0
    %1690 = vmatprep.subr.mxu0 0.0
    %1691 = vmatpush1.msra.mxu0 0.0
    %1692 = vmatprep.subr.mxu0 0.0
    %1693 = vmatpush1.msra.mxu0 0.0
    %1694 = vmatprep.subr.mxu0 0.0
    %1695 = vmatpush1.msra.mxu0 0.0
    %1696 = vmatprep.subr.mxu0 0.0
    %1697 = vmatpush1.msra.mxu0 0.0
    %1698 = vmatprep.subr.mxu0 0.0
    %1699 = vmatpush1.msra.mxu0 0.0
    %1700 = vmatprep.subr.mxu0 0.0
    %1701 = vmatpush1.msra.mxu0 0.0
    %1702 = vmatprep.subr.mxu0 0.0
    %1703 = vmatpush1.msra.mxu0 0.0
    %1704 = vmatprep.subr.mxu0 0.0
    %1705 = vmatpush1.msra.mxu0 0.0
    %1706 = vmatprep.mubr.f32.mxu0 0.0
    %1707 = vmatmul.mubr.f32.gmra.mrb[0].mxu0 %v1640
    %v1708 = vpop.f32.mrb[0].mxu0
    %v1709 = vadd.f32 0.0, %v1708
    %v1710 = vpop.f32.mrb[0].mxu0
    %v1711 = vadd.f32 0.0, %v1710
    %1712 = vdwg.mxu0
    %v1713 = vlaneseq
    %v1714 = vshrl.u32 %v1713, 7
    %v1715 = vsub.s32 0, %v1714
    %v1716 = vrot.slane %v1709, %v1715
    %v1717 = vlaneseq
    %v1718 = vshrl.u32 %v1717, 7
    %v1719 = vsub.s32 0, %v1718
    %v1720 = vrot.slane %v1711, %v1719
    %v1721 = vsub.f32 %v1512, %v1716
    %v1722 = vsub.f32 %v1514, %v1720
    %v1723 = vmul.f32 %v1721, %v1721
    %v1724 = vmul.f32 %v1722, %v1722
    %v1725 = vsel %vm1552, %v1723, 0.0
    %v1726 = vrot.slane %v1725, 4
    %v1727 = vadd.f32 %v1725, %v1726
    %v1728 = vrot.slane %v1727, 2
    %v1729 = vadd.f32 %v1727, %v1728
    %v1730 = vrot.slane %v1729, 1
    %v1731 = vadd.f32 %v1729, %v1730
    %v1732 = vsel %vm1552, %v1724, 0.0
    %v1733 = vrot.slane %v1732, 4
    %v1734 = vadd.f32 %v1732, %v1733
    %v1735 = vrot.slane %v1734, 2
    %v1736 = vadd.f32 %v1734, %v1735
    %v1737 = vrot.slane %v1736, 1
    %v1738 = vadd.f32 %v1736, %v1737
    %1739 = vmatprep.subr.mxu0 0.0
    %1740 = vmatpush1.msra.mxu0 %v1516
    %1741 = vmatprep.subr.mxu0 0.0
    %1742 = vmatpush1.msra.mxu0 %v1517
    %1743 = vmatprep.subr.mxu0 0.0
    %1744 = vmatpush1.msra.mxu0 %v1518
    %1745 = vmatprep.subr.mxu0 0.0
    %1746 = vmatpush1.msra.mxu0 %v1519
    %1747 = vmatprep.subr.mxu0 0.0
    %1748 = vmatpush1.msra.mxu0 %v1520
    %1749 = vmatprep.subr.mxu0 0.0
    %1750 = vmatpush1.msra.mxu0 %v1521
    %1751 = vmatprep.subr.mxu0 0.0
    %1752 = vmatpush1.msra.mxu0 %v1522
    %1753 = vmatprep.subr.mxu0 0.0
    %1754 = vmatpush1.msra.mxu0 %v1523
    %1755 = vmatprep.subr.mxu0 0.0
    %1756 = vmatpush1.msra.mxu0 %v1524
    %1757 = vmatprep.subr.mxu0 0.0
    %1758 = vmatpush1.msra.mxu0 %v1525
    %1759 = vmatprep.subr.mxu0 0.0
    %1760 = vmatpush1.msra.mxu0 %v1526
    %1761 = vmatprep.subr.mxu0 0.0
    %1762 = vmatpush1.msra.mxu0 %v1527
    %1763 = vmatprep.subr.mxu0 0.0
    %1764 = vmatpush1.msra.mxu0 %v1528
    %1765 = vmatprep.subr.mxu0 0.0
    %1766 = vmatpush1.msra.mxu0 %v1529
    %1767 = vmatprep.subr.mxu0 0.0
    %1768 = vmatpush1.msra.mxu0 %v1530
    %1769 = vmatprep.subr.mxu0 0.0
    %1770 = vmatpush1.msra.mxu0 %v1531
    %1771 = vmatprep.subr.mxu0 0.0
    %1772 = vmatpush1.msra.mxu0 %v1532
    %1773 = vmatprep.subr.mxu0 0.0
    %1774 = vmatpush1.msra.mxu0 %v1533
    %1775 = vmatprep.subr.mxu0 0.0
    %1776 = vmatpush1.msra.mxu0 %v1534
    %1777 = vmatprep.subr.mxu0 0.0
    %1778 = vmatpush1.msra.mxu0 %v1535
    %1779 = vmatprep.subr.mxu0 0.0
    %1780 = vmatpush1.msra.mxu0 %v1536
    %1781 = vmatprep.subr.mxu0 0.0
    %1782 = vmatpush1.msra.mxu0 %v1537
    %1783 = vmatprep.subr.mxu0 0.0
    %1784 = vmatpush1.msra.mxu0 %v1538
    %1785 = vmatprep.subr.mxu0 0.0
    %1786 = vmatpush1.msra.mxu0 %v1539
    %1787 = vmatprep.subr.mxu0 0.0
    %1788 = vmatpush1.msra.mxu0 %v1540
    %1789 = vmatprep.subr.mxu0 0.0
    %1790 = vmatpush1.msra.mxu0 %v1541
    %1791 = vmatprep.subr.mxu0 0.0
    %1792 = vmatpush1.msra.mxu0 %v1542
    %1793 = vmatprep.subr.mxu0 0.0
    %1794 = vmatpush1.msra.mxu0 %v1543
    %1795 = vmatprep.subr.mxu0 0.0
    %1796 = vmatpush1.msra.mxu0 %v1544
    %1797 = vmatprep.subr.mxu0 0.0
    %1798 = vmatpush1.msra.mxu0 %v1545
    %1799 = vmatprep.subr.mxu0 0.0
    %1800 = vmatpush1.msra.mxu0 %v1546
    %1801 = vmatprep.subr.mxu0 0.0
    %1802 = vmatpush1.msra.mxu0 %v1547
    %1803 = vmatprep.mubr.f32.mxu0 %v1738
    %1804 = vmatmul.mubr.f32.gmra.mrb[0].mxu0 %v1731
    %v1805 = vpop.f32.mrb[0].mxu0
    %v1806 = vadd.f32 0.0, %v1805
    %v1807 = vpop.f32.mrb[0].mxu0
    %1808 = vdwg.mxu0
    %v1809 = vmul.f32 %v1806, 0.03125
    %v1810 = vld [vmem:[#allocation8] sm:$0x1]
    %v1811 = vadd.f32 %v1809, 1e-05
    %v1812 = vrsqrt.pop %v1811
    %v1813 = vmul.f32 %v1810, %v1812
    %v1814 = vld [vmem:[#allocation10] sm:$0x1]
    %v1815 = vmul.f32 %v1637, %v1813
    %v1816 = vsub.f32 %v1814, %v1815
    %v1818 = vsel %vm1638, %v1813, 0
    %1820 = vmatprep.subr.mxu0 %v1549
    %1821 = vmatpush1.msra.mxu0 %v1548
    %1822 = vmatprep.subr.mxu0 %v1551
    %1823 = vmatpush1.msra.mxu0 %v1550
    %1824 = vmatprep.subr.mxu0 0.0
    %1825 = vmatpush1.msra.mxu0 0.0
    %1826 = vmatprep.subr.mxu0 0.0
    %1827 = vmatpush1.msra.mxu0 0.0
    %1828 = vmatprep.subr.mxu0 0.0
    %1829 = vmatpush1.msra.mxu0 0.0
    %1830 = vmatprep.subr.mxu0 0.0
    %1831 = vmatpush1.msra.mxu0 0.0
    %1832 = vmatprep.subr.mxu0 0.0
    %1833 = vmatpush1.msra.mxu0 0.0
    %1834 = vmatprep.subr.mxu0 0.0
    %1835 = vmatpush1.msra.mxu0 0.0
    %1836 = vmatprep.subr.mxu0 0.0
    %1837 = vmatpush1.msra.mxu0 0.0
    %1838 = vmatprep.subr.mxu0 0.0
    %1839 = vmatpush1.msra.mxu0 0.0
    %1840 = vmatprep.subr.mxu0 0.0
    %1841 = vmatpush1.msra.mxu0 0.0
    %1842 = vmatprep.subr.mxu0 0.0
    %1843 = vmatpush1.msra.mxu0 0.0
    %1844 = vmatprep.subr.mxu0 0.0
    %1845 = vmatpush1.msra.mxu0 0.0
    %1846 = vmatprep.subr.mxu0 0.0
    %1847 = vmatpush1.msra.mxu0 0.0
    %1848 = vmatprep.subr.mxu0 0.0
    %1849 = vmatpush1.msra.mxu0 0.0
    %1850 = vmatprep.subr.mxu0 0.0
    %1851 = vmatpush1.msra.mxu0 0.0
    %1852 = vmatprep.subr.mxu0 0.0
    %1853 = vmatpush1.msra.mxu0 0.0
    %1854 = vmatprep.subr.mxu0 0.0
    %1855 = vmatpush1.msra.mxu0 0.0
    %1856 = vmatprep.subr.mxu0 0.0
    %1857 = vmatpush1.msra.mxu0 0.0
    %1858 = vmatprep.subr.mxu0 0.0
    %1859 = vmatpush1.msra.mxu0 0.0
    %1860 = vmatprep.subr.mxu0 0.0
    %1861 = vmatpush1.msra.mxu0 0.0
    %1862 = vmatprep.subr.mxu0 0.0
    %1863 = vmatpush1.msra.mxu0 0.0
    %1864 = vmatprep.subr.mxu0 0.0
    %1865 = vmatpush1.msra.mxu0 0.0
    %1866 = vmatprep.subr.mxu0 0.0
    %1867 = vmatpush1.msra.mxu0 0.0
    %1868 = vmatprep.subr.mxu0 0.0
    %1869 = vmatpush1.msra.mxu0 0.0
    %1870 = vmatprep.subr.mxu0 0.0
    %1871 = vmatpush1.msra.mxu0 0.0
    %1872 = vmatprep.subr.mxu0 0.0
    %1873 = vmatpush1.msra.mxu0 0.0
    %1874 = vmatprep.subr.mxu0 0.0
    %1875 = vmatpush1.msra.mxu0 0.0
    %1876 = vmatprep.subr.mxu0 0.0
    %1877 = vmatpush1.msra.mxu0 0.0
    %1878 = vmatprep.subr.mxu0 0.0
    %1879 = vmatpush1.msra.mxu0 0.0
    %1880 = vmatprep.subr.mxu0 0.0
    %1881 = vmatpush1.msra.mxu0 0.0
    %1882 = vmatprep.subr.mxu0 0.0
    %1883 = vmatpush1.msra.mxu0 0.0
    %1884 = vmatprep.mubr.f32.mxu0 0.0
    %1885 = vmatmul.mubr.f32.gmra.mrb[0].mxu0 %v1818
    %v1886 = vpop.f32.mrb[0].mxu0
    %v1887 = vadd.f32 0.0, %v1886
    %v1888 = vpop.f32.mrb[0].mxu0
    %v1889 = vadd.f32 0.0, %v1888
    %1890 = vdwg.mxu0
    %v1892 = vsel %vm1638, %v1816, 0
    %1894 = vmatprep.subr.mxu0 %v1549
    %1895 = vmatpush1.msra.mxu0 %v1548
    %1896 = vmatprep.subr.mxu0 %v1551
    %1897 = vmatpush1.msra.mxu0 %v1550
    %1898 = vmatprep.subr.mxu0 0.0
    %1899 = vmatpush1.msra.mxu0 0.0
    %1900 = vmatprep.subr.mxu0 0.0
    %1901 = vmatpush1.msra.mxu0 0.0
    %1902 = vmatprep.subr.mxu0 0.0
    %1903 = vmatpush1.msra.mxu0 0.0
    %1904 = vmatprep.subr.mxu0 0.0
    %1905 = vmatpush1.msra.mxu0 0.0
    %1906 = vmatprep.subr.mxu0 0.0
    %1907 = vmatpush1.msra.mxu0 0.0
    %1908 = vmatprep.subr.mxu0 0.0
    %1909 = vmatpush1.msra.mxu0 0.0
    %1910 = vmatprep.subr.mxu0 0.0
    %1911 = vmatpush1.msra.mxu0 0.0
    %1912 = vmatprep.subr.mxu0 0.0
    %1913 = vmatpush1.msra.mxu0 0.0
    %1914 = vmatprep.subr.mxu0 0.0
    %1915 = vmatpush1.msra.mxu0 0.0
    %1916 = vmatprep.subr.mxu0 0.0
    %1917 = vmatpush1.msra.mxu0 0.0
    %1918 = vmatprep.subr.mxu0 0.0
    %1919 = vmatpush1.msra.mxu0 0.0
    %1920 = vmatprep.subr.mxu0 0.0
    %1921 = vmatpush1.msra.mxu0 0.0
    %1922 = vmatprep.subr.mxu0 0.0
    %1923 = vmatpush1.msra.mxu0 0.0
    %1924 = vmatprep.subr.mxu0 0.0
    %1925 = vmatpush1.msra.mxu0 0.0
    %1926 = vmatprep.subr.mxu0 0.0
    %1927 = vmatpush1.msra.mxu0 0.0
    %1928 = vmatprep.subr.mxu0 0.0
    %1929 = vmatpush1.msra.mxu0 0.0
    %1930 = vmatprep.subr.mxu0 0.0
    %1931 = vmatpush1.msra.mxu0 0.0
    %1932 = vmatprep.subr.mxu0 0.0
    %1933 = vmatpush1.msra.mxu0 0.0
    %1934 = vmatprep.subr.mxu0 0.0
    %1935 = vmatpush1.msra.mxu0 0.0
    %1936 = vmatprep.subr.mxu0 0.0
    %1937 = vmatpush1.msra.mxu0 0.0
    %1938 = vmatprep.subr.mxu0 0.0
    %1939 = vmatpush1.msra.mxu0 0.0
    %1940 = vmatprep.subr.mxu0 0.0
    %1941 = vmatpush1.msra.mxu0 0.0
    %1942 = vmatprep.subr.mxu0 0.0
    %1943 = vmatpush1.msra.mxu0 0.0
    %1944 = vmatprep.subr.mxu0 0.0
    %1945 = vmatpush1.msra.mxu0 0.0
    %1946 = vmatprep.subr.mxu0 0.0
    %1947 = vmatpush1.msra.mxu0 0.0
    %1948 = vmatprep.subr.mxu0 0.0
    %1949 = vmatpush1.msra.mxu0 0.0
    %1950 = vmatprep.subr.mxu0 0.0
    %1951 = vmatpush1.msra.mxu0 0.0
    %1952 = vmatprep.subr.mxu0 0.0
    %1953 = vmatpush1.msra.mxu0 0.0
    %1954 = vmatprep.subr.mxu0 0.0
    %1955 = vmatpush1.msra.mxu0 0.0
    %1956 = vmatprep.subr.mxu0 0.0
    %1957 = vmatpush1.msra.mxu0 0.0
    %1958 = vmatprep.mubr.f32.mxu0 0.0
    %1959 = vmatmul.mubr.f32.gmra.mrb[0].mxu0 %v1892
    %v1960 = vpop.f32.mrb[0].mxu0
    %v1961 = vadd.f32 0.0, %v1960
    %v1962 = vpop.f32.mrb[0].mxu0
    %v1963 = vadd.f32 0.0, %v1962
    %1964 = vdwg.mxu0
    %v1965 = vlaneseq
    %v1966 = vshrl.u32 %v1965, 7
    %v1967 = vsub.s32 0, %v1966
    %v1968 = vrot.slane %v1887, %v1967
    %v1969 = vlaneseq
    %v1970 = vshrl.u32 %v1969, 7
    %v1971 = vsub.s32 0, %v1970
    %v1972 = vrot.slane %v1889, %v1971
    %v1973 = vmul.f32 %v1512, %v1968
    %v1974 = vmul.f32 %v1514, %v1972
    %v1975 = vlaneseq
    %v1976 = vshrl.u32 %v1975, 7
    %v1977 = vsub.s32 0, %v1976
    %v1978 = vrot.slane %v1961, %v1977
    %v1979 = vlaneseq
    %v1980 = vshrl.u32 %v1979, 7
    %v1981 = vsub.s32 0, %v1980
    %v1982 = vrot.slane %v1963, %v1981
    %v1983 = vadd.f32 %v1973, %v1978
    %v1984 = vadd.f32 %v1974, %v1982
    %vm1985 = vcmp.ge.f32.partialorder %v1983, 0.0
    %vm1986 = vcmp.ge.f32.partialorder %v1984, 0.0
    %v1987 = vmul.f32 %v1983, 0.2
    %v1988 = vmul.f32 %v1984, 0.2
    %v1989 = vsel %vm1985, %v1983, %v1987
    %v1990 = vsel %vm1986, %v1984, %v1988
    %v1993 = vcombine.low %v1989, %v1990
    %v1995 = vunpack.c.l.s4 1983009808
    %v1996 = vunpack.c.0.s8 %v1995
    %v1997 = vlaneseq
    %v1998 = vshrl.u32 %v1997, 7
    %v1999 = vsub.s32 %v1996, %v1998
    %v2000 = vrot.slane %v1993, %v1999
    %2002 = vst [vmem:[#allocation13] sm:$0xf] %v2000
    %v2003 = vld [vmem:[%s7] sm:$0xff]
    %v2004 = vld [vmem:[%s7 + $0x8] sm:$0xff]
    %v2005 = vld [vmem:[%s7 + $0x10] sm:$0xff]
    %v2006 = vld [vmem:[%s7 + $0x18] sm:$0xff]
    %v2007 = vld [vmem:[%s7 + $0x20] sm:$0xff]
    %v2008 = vld [vmem:[%s7 + $0x28] sm:$0xff]
    %v2009 = vld [vmem:[%s7 + $0x30] sm:$0xff]
    %v2010 = vld [vmem:[%s7 + $0x38] sm:$0xff]
    %v2011 = vld [vmem:[%s7 + $0x40] sm:$0xff]
    %v2012 = vld [vmem:[%s7 + $0x48] sm:$0xff]
    %v2013 = vld [vmem:[%s7 + $0x50] sm:$0xff]
    %v2014 = vld [vmem:[%s7 + $0x58] sm:$0xff]
    %v2015 = vld [vmem:[%s7 + $0x60] sm:$0xff]
    %v2016 = vld [vmem:[%s7 + $0x68] sm:$0xff]
    %v2017 = vld [vmem:[%s7 + $0x70] sm:$0xff]
    %v2018 = vld [vmem:[%s7 + $0x78] sm:$0xff]
    %v2019 = vld [vmem:[%s7 + $0x80] sm:$0xff]
    %v2020 = vld [vmem:[%s7 + $0x88] sm:$0xff]
    %v2021 = vld [vmem:[%s7 + $0x90] sm:$0xff]
    %v2022 = vld [vmem:[%s7 + $0x98] sm:$0xff]
    %v2023 = vld [vmem:[%s7 + $0xa0] sm:$0xff]
    %v2024 = vld [vmem:[%s7 + $0xa8] sm:$0xff]
    %v2025 = vld [vmem:[%s7 + $0xb0] sm:$0xff]
    %v2026 = vld [vmem:[%s7 + $0xb8] sm:$0xff]
    %v2027 = vld [vmem:[%s7 + $0xc0] sm:$0xff]
    %v2028 = vld [vmem:[%s7 + $0xc8] sm:$0xff]
    %v2029 = vld [vmem:[%s7 + $0xd0] sm:$0xff]
    %v2030 = vld [vmem:[%s7 + $0xd8] sm:$0xff]
    %v2031 = vld [vmem:[%s7 + $0xe0] sm:$0xff]
    %v2032 = vld [vmem:[%s7 + $0xe8] sm:$0xff]
    %v2033 = vld [vmem:[%s7 + $0xf0] sm:$0xff]
    %v2034 = vld [vmem:[%s7 + $0xf8] sm:$0xff]
    %2035 = vmatprep.subr.mxu0 0.0
    %2036 = vmatpush1.msra.mxu0 %v2003
    %2037 = vmatprep.subr.mxu0 0.0
    %2038 = vmatpush1.msra.mxu0 %v2004
    %2039 = vmatprep.subr.mxu0 0.0
    %2040 = vmatpush1.msra.mxu0 %v2005
    %2041 = vmatprep.subr.mxu0 0.0
    %2042 = vmatpush1.msra.mxu0 %v2006
    %2043 = vmatprep.subr.mxu0 0.0
    %2044 = vmatpush1.msra.mxu0 %v2007
    %2045 = vmatprep.subr.mxu0 0.0
    %2046 = vmatpush1.msra.mxu0 %v2008
    %2047 = vmatprep.subr.mxu0 0.0
    %2048 = vmatpush1.msra.mxu0 %v2009
    %2049 = vmatprep.subr.mxu0 0.0
    %2050 = vmatpush1.msra.mxu0 %v2010
    %2051 = vmatprep.subr.mxu0 0.0
    %2052 = vmatpush1.msra.mxu0 %v2011
    %2053 = vmatprep.subr.mxu0 0.0
    %2054 = vmatpush1.msra.mxu0 %v2012
    %2055 = vmatprep.subr.mxu0 0.0
    %2056 = vmatpush1.msra.mxu0 %v2013
    %2057 = vmatprep.subr.mxu0 0.0
    %2058 = vmatpush1.msra.mxu0 %v2014
    %2059 = vmatprep.subr.mxu0 0.0
    %2060 = vmatpush1.msra.mxu0 %v2015
    %2061 = vmatprep.subr.mxu0 0.0
    %2062 = vmatpush1.msra.mxu0 %v2016
    %2063 = vmatprep.subr.mxu0 0.0
    %2064 = vmatpush1.msra.mxu0 %v2017
    %2065 = vmatprep.subr.mxu0 0.0
    %2066 = vmatpush1.msra.mxu0 %v2018
    %2067 = vmatprep.subr.mxu0 0.0
    %2068 = vmatpush1.msra.mxu0 %v2019
    %2069 = vmatprep.subr.mxu0 0.0
    %2070 = vmatpush1.msra.mxu0 %v2020
    %2071 = vmatprep.subr.mxu0 0.0
    %2072 = vmatpush1.msra.mxu0 %v2021
    %2073 = vmatprep.subr.mxu0 0.0
    %2074 = vmatpush1.msra.mxu0 %v2022
    %2075 = vmatprep.subr.mxu0 0.0
    %2076 = vmatpush1.msra.mxu0 %v2023
    %2077 = vmatprep.subr.mxu0 0.0
    %2078 = vmatpush1.msra.mxu0 %v2024
    %2079 = vmatprep.subr.mxu0 0.0
    %2080 = vmatpush1.msra.mxu0 %v2025
    %2081 = vmatprep.subr.mxu0 0.0
    %2082 = vmatpush1.msra.mxu0 %v2026
    %2083 = vmatprep.subr.mxu0 0.0
    %2084 = vmatpush1.msra.mxu0 %v2027
    %2085 = vmatprep.subr.mxu0 0.0
    %2086 = vmatpush1.msra.mxu0 %v2028
    %2087 = vmatprep.subr.mxu0 0.0
    %2088 = vmatpush1.msra.mxu0 %v2029
    %2089 = vmatprep.subr.mxu0 0.0
    %2090 = vmatpush1.msra.mxu0 %v2030
    %2091 = vmatprep.subr.mxu0 0.0
    %2092 = vmatpush1.msra.mxu0 %v2031
    %2093 = vmatprep.subr.mxu0 0.0
    %2094 = vmatpush1.msra.mxu0 %v2032
    %2095 = vmatprep.subr.mxu0 0.0
    %2096 = vmatpush1.msra.mxu0 %v2033
    %2097 = vmatprep.subr.mxu0 0.0
    %2098 = vmatpush1.msra.mxu0 %v2034
    %2099 = vmatprep.mubr.f32.mxu0 %v1990
    %2100 = vmatmul.mubr.f32.gmra.mrb[0].mxu0 %v1989
    %v2101 = vpop.f32.mrb[0].mxu0
    %v2102 = vadd.f32 0.0, %v2101
    %v2103 = vpop.f32.mrb[0].mxu0
    %2104 = vdwg.mxu0
    %v2105 = vxor.u32 %v2102, 2147483648
    %v2106 = vmul.f32 %v2105, 1.442695
    %v2107 = vpow.pop %v2106
    %v2108 = vadd.f32 %v2107, 1.0
    %v2109 = vrcp.pop %v2108
    %v2110 = vmul.f32 1.0, %v2109
    %vm2111 = vcmask 1024
    %2112 = vst.msk [vmem:[%s9] sm:$0x3] %vm2111, %v2110
    // Predicated region
    $region58: #{tpu_custom_call.1} parent=1 // pred_check
      _
    $region59: #{tpu_custom_call.1} parent=1 // pred_check_branch
      %2114 = sbr.rel (0) target = $region61
    $region60: #{tpu_custom_call.1} parent=1 // pred_region
      %s2116 = ssub.s32 64, 64
      %2117 = vsyncadd [#allocation4], %s2116
      %s2119 = sshll.u32 [#allocation13], 4
      %s2120 = int_to_ptr.vmem [resolvable:$true] %s2119
      %2122 = dma.vmem_to_hbm [thread:$0]  %s2120, 64, %s8, [#allocation4]
    $region61: #{tpu_custom_call.1} parent=1 // pred_fallthru
      _
    // Predicated region
    $region62: #{tpu_custom_call.1} parent=1 // pred_check
      _
    $region63: #{tpu_custom_call.1} parent=1 // pred_check_branch
      %2124 = sbr.rel (0) target = $region65
    $region64: #{tpu_custom_call.1} parent=1 // pred_region
      _
    $region65: #{tpu_custom_call.1} parent=1 // pred_fallthru
      _
    // Predicated region
    $region66: #{tpu_custom_call.1} parent=1 // pred_check
      _
    $region67: #{tpu_custom_call.1} parent=1 // pred_check_branch
      %2126 = sbr.rel (0) target = $region69
    $region68: #{tpu_custom_call.1} parent=1 // pred_region
      %2127 = dma.done [#allocation4], 64
    $region69: #{tpu_custom_call.1} parent=1 // pred_fallthru
      _
    // Predicated region
    $region70: #{tpu_custom_call.1} parent=1 // pred_check
      _
    $region71: #{tpu_custom_call.1} parent=1 // pred_check_branch
      %2129 = sbr.rel (0) target = $region73
    $region72: #{tpu_custom_call.1} parent=1 // pred_region
      _
    $region73: #{tpu_custom_call.1} parent=1 // pred_fallthru
      _
    %2130 = vsyncpa [#allocation3], 1
    %2131 = vsyncpa [#allocation6], 1
    %2132 = vsyncpa [#allocation9], 1
    %2133 = vsyncpa [#allocation12], 1
    %2134 = vsyncpa [#allocation4], 1

</llo_original>
